<compile_context>
chip_gen: v7x
topology: tpu7x:2x2x1
jax: 0.10.0
libtpu: 0.0.40
codegen_flags: <defaults>
</compile_context>

<pallas_src>
import math
from functools import partial

import jax
import jax.numpy as jnp
from jax.experimental import pallas as pl
from jax.experimental.pallas import tpu as pltpu


# ---------------------------------------------------------------------------
# Fused kernel: per grid step -- one batch block, ALL heads.
#   shared per-head projections, masked softmax, attn @ V, fused fc_out.
# ---------------------------------------------------------------------------
def _fused_mha_kernel(v_ref, k_ref, q_ref, m_ref,
                      wv_ref, wk_ref, wq_ref, wfc_ref, b_ref,
                      o_ref, *, heads):
    G, q_len, d = q_ref.shape            # G = batch_block * heads (folded)
    k_len = k_ref.shape[1]
    v_len = v_ref.shape[1]
    B = G // heads                       # batch elements in this block
    E = wfc_ref.shape[1]                 # embed = heads * d
    cdt = q_ref.dtype                    # matmul operand dtype (f32 or bf16)

    # Shared per-head projections: one lane-packed 2-D matmul each
    # (leading dims merged -- layout no-op).  f32 accumulation on the MXU.
    def project(x_ref, w_ref, L):
        x = x_ref[...].reshape(G * L, d)
        y = jnp.dot(x, w_ref[...], preferred_element_type=jnp.float32)
        return y.astype(cdt).reshape(G, L, d)

    qh = project(q_ref, wq_ref, q_len)   # 1/sqrt(E) scale pre-folded into wq
    kh = project(k_ref, wk_ref, k_len)
    vh = project(v_ref, wv_ref, v_len)

    # scores[g, q, k], batched over the folded (batch, head) axis (f32).
    s = jax.lax.dot_general(qh, kh, (((2,), (2,)), ((0,), (0,))),
                            preferred_element_type=jnp.float32)    # (G, Lq, Lk)

    # masked_fill(mask == 0, -1e25): mask is shared across heads, so view the
    # scores as (B, H, Lq, Lk) (leading-dim split) and broadcast the (B,1,..)
    # int8 mask.  Widen i8 -> i32 (cheap unpack) instead of an f32 convert.
    s4 = s.reshape(B, heads, q_len, k_len)
    keep = m_ref[...].astype(jnp.int32)                            # (B,1,Lq,Lk)
    s4 = jnp.where(keep == 0, jnp.float32(-1e25), s4)

    # Softmax over keys, all in f32 (v5e-safe); divide via the EUP.
    mx = jnp.max(s4, axis=-1, keepdims=True)
    p = jnp.exp(s4 - mx)
    denom = jnp.sum(p, axis=-1, keepdims=True)
    attn = (p * pl.reciprocal(denom, approx=True)).reshape(G, q_len, k_len)

    # ctx[g, q, d] = sum_k attn[g, q, k] * vh[g, k, d]
    ctx = jax.lax.dot_general(attn.astype(cdt), vh,
                              (((2,), (1,)), ((0,), (0,))),
                              preferred_element_type=jnp.float32)  # (G, Lq, d)

    # Fused fc_out WITHOUT materializing the head concat:
    #   out[b, q, :] = sum_h ctx[b, h, q, :] @ Wfc^T[h*d:(h+1)*d, :] + bias
    # Each term is a required (B*Lq, d) @ (d, E) matmul -- exact fc FLOPs,
    # no transposes/copies.  (For very large head counts, switch to a
    # head-axis reduction grid instead of this static unroll.)
    ctx4 = ctx.reshape(B, heads, q_len, d)
    acc = jnp.zeros((B * q_len, E), jnp.float32)
    for h in range(heads):
        piece = ctx4[:, h].reshape(B * q_len, d).astype(wfc_ref.dtype)
        acc = acc + jnp.dot(piece, wfc_ref[h * d:(h + 1) * d, :],
                            preferred_element_type=jnp.float32)

    out = (acc + b_ref[...]).reshape(B, q_len, E)                  # lane-dense
    o_ref[...] = out.astype(o_ref.dtype)


# ---------------------------------------------------------------------------
# Wrapper: layout plumbing (head folding, pre-transposed/pre-scaled weights,
# int8 mask), grid/BlockSpec setup, pallas_call.
# ---------------------------------------------------------------------------
def self_attention(values, keys, query, mask, params, heads, *,
                   compute_dtype=jnp.float32, batch_block=None):
    N, q_len, embed = query.shape
    v_len = values.shape[1]
    k_len = keys.shape[1]
    d = embed // heads
    assert d * heads == embed
    scale = 1.0 / math.sqrt(embed)
    cdt = jnp.dtype(compute_dtype)

    if mask is None:                      # module allows mask=None
        mask = jnp.ones((N, 1, q_len, k_len), jnp.float32)

    # Batch block: largest divisor of N that still yields >= 2 grid steps
    # (keeps both v7x TensorCores busy); otherwise a single step.
    if batch_block is None:
        batch_block = 1
        for b in range(N // 2, 0, -1):
            if N % b == 0:
                batch_block = b
                break
    num_blocks = N // batch_block
    assert num_blocks * batch_block == N

    # One-time layout plumbing (plain XLA, outside the kernel): fold
    # (batch, head) onto one leading axis so the kernel never splits heads.
    # In a production stack the upstream projection would emit this layout.
    def to_heads(x, L):
        return (x.reshape(N, L, heads, d)
                 .transpose(0, 2, 1, 3)
                 .reshape(N * heads, L, d)
                 .astype(cdt))

    vh = to_heads(values, v_len)
    kh = to_heads(keys, k_len)
    qh = to_heads(query, q_len)

    # Shared per-head weights, pre-transposed; query scale folded into wq.
    wv_t = params["wv"].T.astype(cdt)                     # (d, d)
    wk_t = params["wk"].T.astype(cdt)                     # (d, d)
    wq_t = (params["wq"].T * scale).astype(cdt)           # (d, d), pre-scaled
    wfc_t = params["w_fc"].T.astype(cdt)                  # (E_in, E_out)
    b_fc = params["b_fc"].reshape(1, embed).astype(jnp.float32)

    # Un-broadcast int8 mask: (N, 1, q_len, k_len) -- 4x smaller HBM/DMA.
    mask_i8 = (mask != 0).astype(jnp.int8)

    G = batch_block * heads

    # Advisory cost estimate so XLA schedules around the custom call.
    flops = int(N * (2 * (v_len + k_len + q_len) * embed * d      # projections
                     + 2 * heads * q_len * k_len * d              # scores
                     + 2 * heads * q_len * v_len * d              # attn @ V
                     + 2 * q_len * embed * embed))                # fc_out
    transcendentals = int(N * heads * q_len * k_len)
    bytes_accessed = int((vh.size + kh.size + qh.size) * cdt.itemsize
                         + mask_i8.size
                         + (3 * d * d + embed * embed) * cdt.itemsize
                         + embed * 4
                         + N * q_len * embed * 4)

    out = pl.pallas_call(
        partial(_fused_mha_kernel, heads=heads),
        out_shape=jax.ShapeDtypeStruct((N, q_len, embed), jnp.float32),
        grid=(num_blocks,),
        in_specs=[
            pl.BlockSpec((G, v_len, d), lambda i: (i, 0, 0)),
            pl.BlockSpec((G, k_len, d), lambda i: (i, 0, 0)),
            pl.BlockSpec((G, q_len, d), lambda i: (i, 0, 0)),
            pl.BlockSpec((batch_block, 1, q_len, k_len), lambda i: (i, 0, 0, 0)),
            pl.BlockSpec((d, d), lambda i: (0, 0)),        # constant index ->
            pl.BlockSpec((d, d), lambda i: (0, 0)),        # weights stay
            pl.BlockSpec((d, d), lambda i: (0, 0)),        # resident in VMEM
            pl.BlockSpec((embed, embed), lambda i: (0, 0)),
            pl.BlockSpec((1, embed), lambda i: (0, 0)),
        ],
        out_specs=pl.BlockSpec((batch_block, q_len, embed), lambda i: (i, 0, 0)),
        compiler_params=pltpu.CompilerParams(
            dimension_semantics=("parallel",),
            vmem_limit_bytes=32 * 1024 * 1024),
        cost_estimate=pl.CostEstimate(
            flops=flops,
            transcendentals=transcendentals,
            bytes_accessed=bytes_accessed),
    )(vh, kh, qh, mask_i8, wv_t, wk_t, wq_t, wfc_t, b_fc)

    return out


# ---------------------------------------------------------------------------
# Pure-JAX reference (mirrors the PyTorch forward exactly)
# ---------------------------------------------------------------------------
def ref_self_attention(values, keys, query, mask, params, heads):
    N, q_len, embed = query.shape
    d = embed // heads
    v = values.reshape(N, -1, heads, d) @ params["wv"].T
    k = keys.reshape(N, -1, heads, d) @ params["wk"].T
    q = query.reshape(N, -1, heads, d) @ params["wq"].T
    scores = jnp.einsum('nqhd,nkhd->nhqk', q, k)
    if mask is not None:
        scores = jnp.where(mask == 0, jnp.float32(-1e25), scores)
    attn = jax.nn.softmax(scores / math.sqrt(embed), axis=3)
    out = jnp.einsum('nhqk,nkhd->nqhd', attn, v).reshape(N, q_len, embed)
    return out @ params["w_fc"].T + params["b_fc"]


if __name__ == "__main__":
    # Small shapes consistent with the module: batch=2, seq=8, embed=32, heads=4.
    N, seq, embed, heads = 2, 8, 32, 4
    d = embed // heads

    key = jax.random.PRNGKey(0)
    kv, kk, kq, km, k1, k2, k3, k4, k5 = jax.random.split(key, 9)

    values = jax.random.normal(kv, (N, seq, embed), dtype=jnp.float32)
    keys_in = jax.random.normal(kk, (N, seq, embed), dtype=jnp.float32)
    query = jax.random.normal(kq, (N, seq, embed), dtype=jnp.float32)
    # binary mask, broadcastable over heads: (N, 1, q_len, k_len)
    mask = (jax.random.uniform(km, (N, 1, seq, seq)) > 0.25).astype(jnp.float32)

    # Deterministic parameter init (PyTorch-Linear-style uniform bounds).
    def uinit(k, shape, fan_in):
        b = 1.0 / math.sqrt(fan_in)
        return jax.random.uniform(k, shape, jnp.float32, -b, b)

    params = {
        "wv": uinit(k1, (d, d), d),
        "wk": uinit(k2, (d, d), d),
        "wq": uinit(k3, (d, d), d),
        "w_fc": uinit(k4, (embed, embed), embed),
        "b_fc": uinit(k5, (embed,), embed),
    }

    ref = ref_self_attention(values, keys_in, query, mask, params, heads)

    # f32 run: tolerance loosened slightly vs 1e-5 because of the approximate
    # (EUP) softmax reciprocal, per the review note.
    out = self_attention(values, keys_in, query, mask, params, heads)
    out = jax.block_until_ready(out)
    assert out.shape == (N, seq, embed)
    assert jnp.allclose(out, ref, rtol=2e-3, atol=2e-3), (
        f"max abs err {jnp.max(jnp.abs(out - ref))}")

    # bf16 matmul-operand run (v6e/v7x MXU path); softmax stays f32 in-kernel.
    out_bf16 = self_attention(values, keys_in, query, mask, params, heads,
                              compute_dtype=jnp.bfloat16)
    out_bf16 = jax.block_until_ready(out_bf16)
    assert out_bf16.shape == (N, seq, embed)
    assert jnp.allclose(out_bf16, ref, rtol=1e-1, atol=1e-1), (
        f"bf16 max abs err {jnp.max(jnp.abs(out_bf16 - ref))}")

    print("KERNEL_OK")
</pallas_src>

<mosaic_0001>
module attributes {stable_mosaic.version = 11 : i64} {
  func.func @_fused_mha_kernel(%arg0: i32, %arg1: memref<4x8x8xf32, #tpu.memory_space<vmem>>, %arg2: memref<4x8x8xf32, #tpu.memory_space<vmem>>, %arg3: memref<4x8x8xf32, #tpu.memory_space<vmem>>, %arg4: memref<1x1x8x8xi8, #tpu.memory_space<vmem>>, %arg5: memref<8x8xf32, #tpu.memory_space<vmem>>, %arg6: memref<8x8xf32, #tpu.memory_space<vmem>>, %arg7: memref<8x8xf32, #tpu.memory_space<vmem>>, %arg8: memref<32x32xf32, #tpu.memory_space<vmem>>, %arg9: memref<1x32xf32, #tpu.memory_space<vmem>>, %arg10: memref<1x8x32xf32, #tpu.memory_space<vmem>>) attributes {dimension_semantics = [#tpu.dimension_semantics<parallel>], iteration_bounds = array<i64: 2>, scalar_prefetch = 0 : i64, scratch_operands = 0 : i64, tpu.core_type = #tpu.core_type<tc>, window_params = [{transform_indices = @transform_0, window_bounds = array<i64: 4, 8, 8>}, {transform_indices = @transform_1, window_bounds = array<i64: 4, 8, 8>}, {transform_indices = @transform_2, window_bounds = array<i64: 4, 8, 8>}, {transform_indices = @transform_3, window_bounds = array<i64: 1, 1, 8, 8>}, {pipeline_mode = #tpu.pipeline_mode<synchronous>, transform_indices = @transform_4, window_bounds = array<i64: 8, 8>}, {pipeline_mode = #tpu.pipeline_mode<synchronous>, transform_indices = @transform_5, window_bounds = array<i64: 8, 8>}, {pipeline_mode = #tpu.pipeline_mode<synchronous>, transform_indices = @transform_6, window_bounds = array<i64: 8, 8>}, {pipeline_mode = #tpu.pipeline_mode<synchronous>, transform_indices = @transform_7, window_bounds = array<i64: 32, 32>}, {pipeline_mode = #tpu.pipeline_mode<synchronous>, transform_indices = @transform_8, window_bounds = array<i64: 1, 32>}, {transform_indices = @transform_9, window_bounds = array<i64: 1, 8, 32>}]} {
    %c0 = arith.constant 0 : index
    %c0_0 = arith.constant 0 : index
    %c0_1 = arith.constant 0 : index
    %0 = vector.load %arg3[%c0, %c0_0, %c0_1] : memref<4x8x8xf32, #tpu.memory_space<vmem>>, vector<4x8x8xf32>
    %1 = vector.shape_cast %0 : vector<4x8x8xf32> to vector<32x8xf32>
    %c0_2 = arith.constant 0 : index
    %c0_3 = arith.constant 0 : index
    %2 = vector.load %arg7[%c0_2, %c0_3] : memref<8x8xf32, #tpu.memory_space<vmem>>, vector<8x8xf32>
    %cst = arith.constant dense<0.000000e+00> : vector<32x8xf32>
    %3 = tpu.matmul %1, %2, %cst {dimension_numbers = #tpu.dot_dimension_numbers<[1], [0], [0], [1], [0, 0, 1, 1], [], []>} : vector<32x8xf32>, vector<8x8xf32>, vector<32x8xf32> -> vector<32x8xf32>
    %4 = vector.shape_cast %3 : vector<32x8xf32> to vector<4x8x8xf32>
    %c0_4 = arith.constant 0 : index
    %c0_5 = arith.constant 0 : index
    %c0_6 = arith.constant 0 : index
    %5 = vector.load %arg2[%c0_4, %c0_5, %c0_6] : memref<4x8x8xf32, #tpu.memory_space<vmem>>, vector<4x8x8xf32>
    %6 = vector.shape_cast %5 : vector<4x8x8xf32> to vector<32x8xf32>
    %c0_7 = arith.constant 0 : index
    %c0_8 = arith.constant 0 : index
    %7 = vector.load %arg6[%c0_7, %c0_8] : memref<8x8xf32, #tpu.memory_space<vmem>>, vector<8x8xf32>
    %cst_9 = arith.constant dense<0.000000e+00> : vector<32x8xf32>
    %8 = tpu.matmul %6, %7, %cst_9 {dimension_numbers = #tpu.dot_dimension_numbers<[1], [0], [0], [1], [0, 0, 1, 1], [], []>} : vector<32x8xf32>, vector<8x8xf32>, vector<32x8xf32> -> vector<32x8xf32>
    %9 = vector.shape_cast %8 : vector<32x8xf32> to vector<4x8x8xf32>
    %c0_10 = arith.constant 0 : index
    %c0_11 = arith.constant 0 : index
    %c0_12 = arith.constant 0 : index
    %10 = vector.load %arg1[%c0_10, %c0_11, %c0_12] : memref<4x8x8xf32, #tpu.memory_space<vmem>>, vector<4x8x8xf32>
    %11 = vector.shape_cast %10 : vector<4x8x8xf32> to vector<32x8xf32>
    %c0_13 = arith.constant 0 : index
    %c0_14 = arith.constant 0 : index
    %12 = vector.load %arg5[%c0_13, %c0_14] : memref<8x8xf32, #tpu.memory_space<vmem>>, vector<8x8xf32>
    %cst_15 = arith.constant dense<0.000000e+00> : vector<32x8xf32>
    %13 = tpu.matmul %11, %12, %cst_15 {dimension_numbers = #tpu.dot_dimension_numbers<[1], [0], [0], [1], [0, 0, 1, 1], [], []>} : vector<32x8xf32>, vector<8x8xf32>, vector<32x8xf32> -> vector<32x8xf32>
    %14 = vector.shape_cast %13 : vector<32x8xf32> to vector<4x8x8xf32>
    %cst_16 = arith.constant dense<0.000000e+00> : vector<4x8x8xf32>
    %15 = tpu.matmul %4, %9, %cst_16 {dimension_numbers = #tpu.dot_dimension_numbers<[2], [2], [1], [1], [0, 0, 0, 1, 1, 1], [0], [0]>} : vector<4x8x8xf32>, vector<4x8x8xf32>, vector<4x8x8xf32> -> vector<4x8x8xf32>
    %16 = vector.shape_cast %15 : vector<4x8x8xf32> to vector<1x4x8x8xf32>
    %c0_17 = arith.constant 0 : index
    %c0_18 = arith.constant 0 : index
    %c0_19 = arith.constant 0 : index
    %c0_20 = arith.constant 0 : index
    %17 = vector.load %arg4[%c0_17, %c0_18, %c0_19, %c0_20] : memref<1x1x8x8xi8, #tpu.memory_space<vmem>>, vector<1x1x8x8xi8>
    %18 = arith.extsi %17 : vector<1x1x8x8xi8> to vector<1x1x8x8xi32>
    %c0_i32 = arith.constant 0 : i32
    %19 = vector.broadcast %c0_i32 : i32 to vector<1x1x8x8xi32>
    %20 = arith.cmpi eq, %18, %19 : vector<1x1x8x8xi32>
    %cst_21 = arith.constant -9.99999956E+24 : f32
    %21 = vector.shape_cast %20 : vector<1x1x8x8xi1> to vector<1x1x8x8xi1>
    %22 = vector.broadcast %21 : vector<1x1x8x8xi1> to vector<1x4x8x8xi1>
    %23 = vector.broadcast %cst_21 : f32 to vector<1x4x8x8xf32>
    %24 = arith.select %22, %23, %16 : vector<1x4x8x8xi1>, vector<1x4x8x8xf32>
    %cst_22 = arith.constant dense<0xFF800000> : vector<1x4x8xf32>
    %25 = vector.multi_reduction <maximumf>, %24, %cst_22 [3] : vector<1x4x8x8xf32> to vector<1x4x8xf32>
    %26 = vector.shape_cast %25 : vector<1x4x8xf32> to vector<1x4x8x1xf32>
    %27 = vector.broadcast %26 : vector<1x4x8x1xf32> to vector<1x4x8x8xf32>
    %28 = arith.subf %24, %27 : vector<1x4x8x8xf32>
    %29 = math.exp %28 : vector<1x4x8x8xf32>
    %cst_23 = arith.constant dense<0.000000e+00> : vector<1x4x8xf32>
    %30 = vector.multi_reduction <add>, %29, %cst_23 [3] : vector<1x4x8x8xf32> to vector<1x4x8xf32>
    %31 = vector.shape_cast %30 : vector<1x4x8xf32> to vector<1x4x8x1xf32>
    %32 = tpu.reciprocal %31 {approx = true} : vector<1x4x8x1xf32> -> vector<1x4x8x1xf32>
    %33 = vector.broadcast %32 : vector<1x4x8x1xf32> to vector<1x4x8x8xf32>
    %34 = arith.mulf %29, %33 : vector<1x4x8x8xf32>
    %35 = vector.shape_cast %34 : vector<1x4x8x8xf32> to vector<4x8x8xf32>
    %cst_24 = arith.constant dense<0.000000e+00> : vector<4x8x8xf32>
    %36 = tpu.matmul %35, %14, %cst_24 {dimension_numbers = #tpu.dot_dimension_numbers<[2], [1], [1], [2], [0, 0, 0, 1, 1, 2], [0], [0]>} : vector<4x8x8xf32>, vector<4x8x8xf32>, vector<4x8x8xf32> -> vector<4x8x8xf32>
    %37 = vector.shape_cast %36 : vector<4x8x8xf32> to vector<1x4x8x8xf32>
    %cst_25 = arith.constant 0.000000e+00 : f32
    %38 = vector.broadcast %cst_25 : f32 to vector<8x32xf32>
    %39 = vector.extract_strided_slice %37 {offsets = [0, 0, 0, 0], sizes = [1, 1, 8, 8], strides = [1, 1, 1, 1]} : vector<1x4x8x8xf32> to vector<1x1x8x8xf32>
    %40 = vector.shape_cast %39 : vector<1x1x8x8xf32> to vector<1x8x8xf32>
    %41 = vector.shape_cast %40 : vector<1x8x8xf32> to vector<8x8xf32>
    %c0_26 = arith.constant 0 : index
    %c0_27 = arith.constant 0 : index
    %42 = vector.load %arg8[%c0_26, %c0_27] : memref<32x32xf32, #tpu.memory_space<vmem>>, vector<8x32xf32>
    %cst_28 = arith.constant dense<0.000000e+00> : vector<8x32xf32>
    %43 = tpu.matmul %41, %42, %cst_28 {dimension_numbers = #tpu.dot_dimension_numbers<[1], [0], [0], [1], [0, 0, 1, 1], [], []>} : vector<8x8xf32>, vector<8x32xf32>, vector<8x32xf32> -> vector<8x32xf32>
    %44 = arith.addf %38, %43 : vector<8x32xf32>
    %45 = vector.extract_strided_slice %37 {offsets = [0, 1, 0, 0], sizes = [1, 1, 8, 8], strides = [1, 1, 1, 1]} : vector<1x4x8x8xf32> to vector<1x1x8x8xf32>
    %46 = vector.shape_cast %45 : vector<1x1x8x8xf32> to vector<1x8x8xf32>
    %47 = vector.shape_cast %46 : vector<1x8x8xf32> to vector<8x8xf32>
    %c8 = arith.constant 8 : index
    %c0_29 = arith.constant 0 : index
    %48 = vector.load %arg8[%c8, %c0_29] : memref<32x32xf32, #tpu.memory_space<vmem>>, vector<8x32xf32>
    %cst_30 = arith.constant dense<0.000000e+00> : vector<8x32xf32>
    %49 = tpu.matmul %47, %48, %cst_30 {dimension_numbers = #tpu.dot_dimension_numbers<[1], [0], [0], [1], [0, 0, 1, 1], [], []>} : vector<8x8xf32>, vector<8x32xf32>, vector<8x32xf32> -> vector<8x32xf32>
    %50 = arith.addf %44, %49 : vector<8x32xf32>
    %51 = vector.extract_strided_slice %37 {offsets = [0, 2, 0, 0], sizes = [1, 1, 8, 8], strides = [1, 1, 1, 1]} : vector<1x4x8x8xf32> to vector<1x1x8x8xf32>
    %52 = vector.shape_cast %51 : vector<1x1x8x8xf32> to vector<1x8x8xf32>
    %53 = vector.shape_cast %52 : vector<1x8x8xf32> to vector<8x8xf32>
    %c16 = arith.constant 16 : index
    %c0_31 = arith.constant 0 : index
    %54 = vector.load %arg8[%c16, %c0_31] : memref<32x32xf32, #tpu.memory_space<vmem>>, vector<8x32xf32>
    %cst_32 = arith.constant dense<0.000000e+00> : vector<8x32xf32>
    %55 = tpu.matmul %53, %54, %cst_32 {dimension_numbers = #tpu.dot_dimension_numbers<[1], [0], [0], [1], [0, 0, 1, 1], [], []>} : vector<8x8xf32>, vector<8x32xf32>, vector<8x32xf32> -> vector<8x32xf32>
    %56 = arith.addf %50, %55 : vector<8x32xf32>
    %57 = vector.extract_strided_slice %37 {offsets = [0, 3, 0, 0], sizes = [1, 1, 8, 8], strides = [1, 1, 1, 1]} : vector<1x4x8x8xf32> to vector<1x1x8x8xf32>
    %58 = vector.shape_cast %57 : vector<1x1x8x8xf32> to vector<1x8x8xf32>
    %59 = vector.shape_cast %58 : vector<1x8x8xf32> to vector<8x8xf32>
    %c24 = arith.constant 24 : index
    %c0_33 = arith.constant 0 : index
    %60 = vector.load %arg8[%c24, %c0_33] : memref<32x32xf32, #tpu.memory_space<vmem>>, vector<8x32xf32>
    %cst_34 = arith.constant dense<0.000000e+00> : vector<8x32xf32>
    %61 = tpu.matmul %59, %60, %cst_34 {dimension_numbers = #tpu.dot_dimension_numbers<[1], [0], [0], [1], [0, 0, 1, 1], [], []>} : vector<8x8xf32>, vector<8x32xf32>, vector<8x32xf32> -> vector<8x32xf32>
    %62 = arith.addf %56, %61 : vector<8x32xf32>
    %c0_35 = arith.constant 0 : index
    %c0_36 = arith.constant 0 : index
    %63 = vector.load %arg9[%c0_35, %c0_36] : memref<1x32xf32, #tpu.memory_space<vmem>>, vector<1x32xf32>
    %64 = vector.broadcast %63 : vector<1x32xf32> to vector<8x32xf32>
    %65 = arith.addf %62, %64 : vector<8x32xf32>
    %66 = vector.shape_cast %65 : vector<8x32xf32> to vector<1x8x32xf32>
    %c0_37 = arith.constant 0 : index
    %c0_38 = arith.constant 0 : index
    %c0_39 = arith.constant 0 : index
    %67 = vector.load %arg10[%c0_37, %c0_38, %c0_39] : memref<1x8x32xf32, #tpu.memory_space<vmem>>, vector<1x8x32xf32>
    tpu.vector_store %arg10[%c0_37, %c0_38, %c0_39], %66 {strides = array<i32>} : memref<1x8x32xf32, #tpu.memory_space<vmem>>, vector<1x8x32xf32>,
    return
  }
  func.func @transform_0(%arg0: i32) -> (i32, i32, i32) {
    %c0_i32 = arith.constant 0 : i32
    %c0_i32_0 = arith.constant 0 : i32
    %c0_i32_1 = arith.constant 0 : i32
    return %arg0, %c0_i32, %c0_i32_0 : i32, i32, i32
  }
  func.func @transform_1(%arg0: i32) -> (i32, i32, i32) {
    %c0_i32 = arith.constant 0 : i32
    %c0_i32_0 = arith.constant 0 : i32
    %c0_i32_1 = arith.constant 0 : i32
    return %arg0, %c0_i32, %c0_i32_0 : i32, i32, i32
  }
  func.func @transform_2(%arg0: i32) -> (i32, i32, i32) {
    %c0_i32 = arith.constant 0 : i32
    %c0_i32_0 = arith.constant 0 : i32
    %c0_i32_1 = arith.constant 0 : i32
    return %arg0, %c0_i32, %c0_i32_0 : i32, i32, i32
  }
  func.func @transform_3(%arg0: i32) -> (i32, i32, i32, i32) {
    %c0_i32 = arith.constant 0 : i32
    %c0_i32_0 = arith.constant 0 : i32
    %c0_i32_1 = arith.constant 0 : i32
    %c0_i32_2 = arith.constant 0 : i32
    return %arg0, %c0_i32, %c0_i32_0, %c0_i32_1 : i32, i32, i32, i32
  }
  func.func @transform_4(%arg0: i32) -> (i32, i32) {
    %c0_i32 = arith.constant 0 : i32
    %c0_i32_0 = arith.constant 0 : i32
    %c0_i32_1 = arith.constant 0 : i32
    return %c0_i32, %c0_i32_0 : i32, i32
  }
  func.func @transform_5(%arg0: i32) -> (i32, i32) {
    %c0_i32 = arith.constant 0 : i32
    %c0_i32_0 = arith.constant 0 : i32
    %c0_i32_1 = arith.constant 0 : i32
    return %c0_i32, %c0_i32_0 : i32, i32
  }
  func.func @transform_6(%arg0: i32) -> (i32, i32) {
    %c0_i32 = arith.constant 0 : i32
    %c0_i32_0 = arith.constant 0 : i32
    %c0_i32_1 = arith.constant 0 : i32
    return %c0_i32, %c0_i32_0 : i32, i32
  }
  func.func @transform_7(%arg0: i32) -> (i32, i32) {
    %c0_i32 = arith.constant 0 : i32
    %c0_i32_0 = arith.constant 0 : i32
    %c0_i32_1 = arith.constant 0 : i32
    return %c0_i32, %c0_i32_0 : i32, i32
  }
  func.func @transform_8(%arg0: i32) -> (i32, i32) {
    %c0_i32 = arith.constant 0 : i32
    %c0_i32_0 = arith.constant 0 : i32
    %c0_i32_1 = arith.constant 0 : i32
    return %c0_i32, %c0_i32_0 : i32, i32
  }
  func.func @transform_9(%arg0: i32) -> (i32, i32, i32) {
    %c0_i32 = arith.constant 0 : i32
    %c0_i32_0 = arith.constant 0 : i32
    %c0_i32_1 = arith.constant 0 : i32
    return %arg0, %c0_i32, %c0_i32_0 : i32, i32, i32
  }
}

</mosaic_0001>

<llo_original>
// kernel: tpu_custom_call.1
$region0: #{tpu_custom_call.1}
  #allocation0 [shape = 'u32[]', space=smem, size = 0x4, offset = 0x4, fixed_abs, tag = 'smem constant byte address 0x4 - core index']
  #allocation1 [shape = 'u32[144,128]{1,0:T(1,128)}', space=vmem, size = 0x12000, scoped, tag = 'internal scratch']
  %s0 = inlined_call_operand.hbm [shape: f32[8,8,8], index: 0, kind: input, shape index: {}]
  %s1 = inlined_call_operand.hbm [shape: f32[8,8,8], index: 1, kind: input, shape index: {}]
  %s2 = inlined_call_operand.hbm [shape: f32[8,8,8], index: 2, kind: input, shape index: {}]
  %s3 = inlined_call_operand.hbm [shape: s8[2,1,8,8], index: 3, kind: input, shape index: {}]
  %s4 = inlined_call_operand.vmem [shape: f32[8,8], index: 4, kind: input, shape index: {}]
  %s5 = inlined_call_operand.vmem [shape: f32[8,8], index: 5, kind: input, shape index: {}]
  %s6 = inlined_call_operand.hbm [shape: f32[8,8], index: 6, kind: input, shape index: {}]
  %s7 = inlined_call_operand.hbm [shape: f32[32,32], index: 7, kind: input, shape index: {}]
  %s8 = inlined_call_operand.vmem [shape: f32[1,32], index: 8, kind: input, shape index: {}]
  %s9 = inlined_call_operand.hbm [shape: f32[2,8,32], index: 9, kind: output, shape index: {}]
  %s10 = sld [smem:[#allocation0]]
  $region93: #{tpu_custom_call.1} parent=0
    _
  %s12 = ssub.s32 1, %s10
  %s13 = scalar_select 0, %s12, %s10
  $region1: #{tpu_custom_call.1} parent=0
    #allocation2 [shape = 'u8[32768]{0}', space=vmem, size = 0x8000, scoped, tag = 'input window, operand 0']
    #allocation3 [shape = 's32[2]{0}', space=sflag, size = 0x8, scoped, tag = 'scoped memory for tpu_custom_call.1']
    #allocation4 [shape = 's32[2]{0}', space=sflag, size = 0x8, scoped, tag = 'scoped memory for tpu_custom_call.1']
    #allocation5 [shape = 'u8[32768]{0}', space=vmem, size = 0x8000, scoped, tag = 'input window, operand 1']
    #allocation6 [shape = 's32[2]{0}', space=sflag, size = 0x8, scoped, tag = 'scoped memory for tpu_custom_call.1']
    #allocation7 [shape = 'u8[32768]{0}', space=vmem, size = 0x8000, scoped, tag = 'input window, operand 2']
    #allocation8 [shape = 'u8[2048]{0}', space=vmem, size = 0x800, scoped, tag = 'input window, operand 3']
    #allocation9 [shape = 's32[2]{0}', space=sflag, size = 0x8, scoped, tag = 'scoped memory for tpu_custom_call.1']
    #allocation10 [shape = 'u8[4096]{0}', space=vmem, size = 0x1000, scoped, tag = 'input window, operand 6, single buffered']
    #allocation11 [shape = 'u8[16384]{0}', space=vmem, size = 0x4000, scoped, tag = 'input window, operand 7, single buffered']
    #allocation12 [shape = 's32[1]{0}', space=sflag, size = 0x4, scoped, tag = 'scoped memory for tpu_custom_call.1']
    #allocation13 [shape = 'u8[8192]{0}', space=vmem, size = 0x2000, scoped, tag = 'output window, operand 0']
    %14 = vsyncpa [#allocation3], 0
    %s15 = scalar_lea.sflag [#allocation3], 1
    %16 = vsyncpa %s15, 0
    %17 = vsyncpa [#allocation6], 0
    %s18 = scalar_lea.sflag [#allocation6], 1
    %19 = vsyncpa %s18, 0
    %20 = vsyncpa [#allocation9], 0
    %s21 = scalar_lea.sflag [#allocation9], 1
    %22 = vsyncpa %s21, 0
    %23 = vsyncpa [#allocation12], 0
    %24 = vsyncpa [#allocation4], 0
    %s25 = scalar_lea.sflag [#allocation4], 1
    %26 = vsyncpa %s25, 0
    loop: start=0, step=1, limit=4
    $region2: #{tpu_custom_call.1} parent=1 // loop_pre_header
      _
    $region3: #{tpu_custom_call.1} parent=1 // loop_header
      %s28 = sphi 0, %s32
      %p29 = scmp.ge.s32.totalorder %s28, 4
      %s38 = sphi 0, %s40
      %s41 = sphi 0, %s38
      %s42 = sphi 0, %s41
      %s58 = sphi 0, %s42
      %s64 = sphi 0, %s66
      %s67 = sphi 0, %s64
      %s68 = sphi 0, %s67
      %s84 = sphi 0, %s68
      %s90 = sphi 0, %s92
      %s93 = sphi 0, %s90
      %s94 = sphi 0, %s93
      %s110 = sphi 0, %s94
      %s116 = sphi 0, %s118
      %s119 = sphi 0, %s116
      %s120 = sphi 0, %s119
      %s136 = sphi 0, %s120
      %s140 = sphi 0, %s140
      %s142 = sphi 0, %s140
      %s143 = sphi 0, %s142
      %s157 = sphi 0, %s143
      %s161 = sphi 0, %s161
      %s163 = sphi 0, %s161
      %s164 = sphi 0, %s163
      %s178 = sphi 0, %s164
      %s182 = sphi 0, %s182
      %s184 = sphi 0, %s182
      %s185 = sphi 0, %s184
      %s199 = sphi 0, %s185
      %s203 = sphi 0, %s203
      %s205 = sphi 0, %s203
      %s206 = sphi 0, %s205
      %s220 = sphi 0, %s206
      %s224 = sphi 0, %s224
      %s226 = sphi 0, %s224
      %s227 = sphi 0, %s226
      %s241 = sphi 0, %s227
      %s247 = sphi 0, %s249
      %s250 = sphi 0, %s247
      %s251 = sphi 0, %s250
      %s267 = sphi 0, %s251
    $region4: #{tpu_custom_call.1} parent=1 // loop_header_branch
      %31 = sbr.rel (%p29) target = $region8
    $region5: #{tpu_custom_call.1} parent=1 // loop_body
      %s33 = ssub.s32 %s28, 1
      %s34 = ssub.s32 %s28, 2
      %s35 = sadd.s32 %s28, 1
      %s36 = ssub.s32 %s28, %s35
      %p37 = scmp.eq.s32.totalorder %s36, 0
      %s39 = sadd.s32 %s38, 1
      %s40 = scalar_select %p37, %s38, %s39
      %p43 = pneg %p37
      %p44 = scmp.eq.s32.totalorder %s28, 1
      %p45 = por %p43, %p44
      %p46 = scmp.ne.s32.totalorder %s38, %s41
      %p47 = scmp.eq.s32.totalorder %s28, 0
      %p48 = por %p46, %p47
      %p49 = scmp.ne.s32.totalorder %s38, %s41
      %p50 = scmp.eq.s32.totalorder %s33, 1
      %p51 = por %p49, %p50
      %p52 = scmp.ne.s32.totalorder %s41, %s42
      %p53 = scmp.eq.s32.totalorder %s33, 0
      %p54 = por %p52, %p53
      %p55 = scmp.ne.s32.totalorder %s41, %s42
      %p56 = scmp.eq.s32.totalorder %s34, 1
      %p57 = por %p55, %p56
      %p59 = scmp.ne.s32.totalorder %s42, %s58
      %p60 = scmp.eq.s32.totalorder %s34, 0
      %p61 = por %p59, %p60
      %s62 = ssub.s32 %s28, %s35
      %p63 = scmp.eq.s32.totalorder %s62, 0
      %s65 = sadd.s32 %s64, 1
      %s66 = scalar_select %p63, %s64, %s65
      %p69 = pneg %p63
      %p70 = scmp.eq.s32.totalorder %s28, 1
      %p71 = por %p69, %p70
      %p72 = scmp.ne.s32.totalorder %s64, %s67
      %p73 = scmp.eq.s32.totalorder %s28, 0
      %p74 = por %p72, %p73
      %p75 = scmp.ne.s32.totalorder %s64, %s67
      %p76 = scmp.eq.s32.totalorder %s33, 1
      %p77 = por %p75, %p76
      %p78 = scmp.ne.s32.totalorder %s67, %s68
      %p79 = scmp.eq.s32.totalorder %s33, 0
      %p80 = por %p78, %p79
      %p81 = scmp.ne.s32.totalorder %s67, %s68
      %p82 = scmp.eq.s32.totalorder %s34, 1
      %p83 = por %p81, %p82
      %p85 = scmp.ne.s32.totalorder %s68, %s84
      %p86 = scmp.eq.s32.totalorder %s34, 0
      %p87 = por %p85, %p86
      %s88 = ssub.s32 %s28, %s35
      %p89 = scmp.eq.s32.totalorder %s88, 0
      %s91 = sadd.s32 %s90, 1
      %s92 = scalar_select %p89, %s90, %s91
      %p95 = pneg %p89
      %p96 = scmp.eq.s32.totalorder %s28, 1
      %p97 = por %p95, %p96
      %p98 = scmp.ne.s32.totalorder %s90, %s93
      %p99 = scmp.eq.s32.totalorder %s28, 0
      %p100 = por %p98, %p99
      %p101 = scmp.ne.s32.totalorder %s90, %s93
      %p102 = scmp.eq.s32.totalorder %s33, 1
      %p103 = por %p101, %p102
      %p104 = scmp.ne.s32.totalorder %s93, %s94
      %p105 = scmp.eq.s32.totalorder %s33, 0
      %p106 = por %p104, %p105
      %p107 = scmp.ne.s32.totalorder %s93, %s94
      %p108 = scmp.eq.s32.totalorder %s34, 1
      %p109 = por %p107, %p108
      %p111 = scmp.ne.s32.totalorder %s94, %s110
      %p112 = scmp.eq.s32.totalorder %s34, 0
      %p113 = por %p111, %p112
      %s114 = ssub.s32 %s28, %s35
      %p115 = scmp.eq.s32.totalorder %s114, 0
      %s117 = sadd.s32 %s116, 1
      %s118 = scalar_select %p115, %s116, %s117
      %p121 = pneg %p115
      %p122 = scmp.eq.s32.totalorder %s28, 1
      %p123 = por %p121, %p122
      %p124 = scmp.ne.s32.totalorder %s116, %s119
      %p125 = scmp.eq.s32.totalorder %s28, 0
      %p126 = por %p124, %p125
      %p127 = scmp.ne.s32.totalorder %s116, %s119
      %p128 = scmp.eq.s32.totalorder %s33, 1
      %p129 = por %p127, %p128
      %p130 = scmp.ne.s32.totalorder %s119, %s120
      %p131 = scmp.eq.s32.totalorder %s33, 0
      %p132 = por %p130, %p131
      %p133 = scmp.ne.s32.totalorder %s119, %s120
      %p134 = scmp.eq.s32.totalorder %s34, 1
      %p135 = por %p133, %p134
      %p137 = scmp.ne.s32.totalorder %s120, %s136
      %p138 = scmp.eq.s32.totalorder %s34, 0
      %p139 = por %p137, %p138
      %s141 = sadd.s32 %s140, 1
      %p144 = scmp.eq.s32.totalorder %s28, 1
      %p145 = scmp.ne.s32.totalorder %s140, %s142
      %p146 = scmp.eq.s32.totalorder %s28, 0
      %p147 = por %p145, %p146
      %p148 = scmp.ne.s32.totalorder %s140, %s142
      %p149 = scmp.eq.s32.totalorder %s33, 1
      %p150 = por %p148, %p149
      %p151 = scmp.ne.s32.totalorder %s142, %s143
      %p152 = scmp.eq.s32.totalorder %s33, 0
      %p153 = por %p151, %p152
      %p154 = scmp.ne.s32.totalorder %s142, %s143
      %p155 = scmp.eq.s32.totalorder %s34, 1
      %p156 = por %p154, %p155
      %p158 = scmp.ne.s32.totalorder %s143, %s157
      %p159 = scmp.eq.s32.totalorder %s34, 0
      %p160 = por %p158, %p159
      %s162 = sadd.s32 %s161, 1
      %p165 = scmp.eq.s32.totalorder %s28, 1
      %p166 = scmp.ne.s32.totalorder %s161, %s163
      %p167 = scmp.eq.s32.totalorder %s28, 0
      %p168 = por %p166, %p167
      %p169 = scmp.ne.s32.totalorder %s161, %s163
      %p170 = scmp.eq.s32.totalorder %s33, 1
      %p171 = por %p169, %p170
      %p172 = scmp.ne.s32.totalorder %s163, %s164
      %p173 = scmp.eq.s32.totalorder %s33, 0
      %p174 = por %p172, %p173
      %p175 = scmp.ne.s32.totalorder %s163, %s164
      %p176 = scmp.eq.s32.totalorder %s34, 1
      %p177 = por %p175, %p176
      %p179 = scmp.ne.s32.totalorder %s164, %s178
      %p180 = scmp.eq.s32.totalorder %s34, 0
      %p181 = por %p179, %p180
      %s183 = sadd.s32 %s182, 1
      %p186 = scmp.eq.s32.totalorder %s28, 1
      %p187 = scmp.ne.s32.totalorder %s182, %s184
      %p188 = scmp.eq.s32.totalorder %s28, 0
      %p189 = por %p187, %p188
      %p190 = scmp.ne.s32.totalorder %s182, %s184
      %p191 = scmp.eq.s32.totalorder %s33, 1
      %p192 = por %p190, %p191
      %p193 = scmp.ne.s32.totalorder %s184, %s185
      %p194 = scmp.eq.s32.totalorder %s33, 0
      %p195 = por %p193, %p194
      %p196 = scmp.ne.s32.totalorder %s184, %s185
      %p197 = scmp.eq.s32.totalorder %s34, 1
      %p198 = por %p196, %p197
      %p200 = scmp.ne.s32.totalorder %s185, %s199
      %p201 = scmp.eq.s32.totalorder %s34, 0
      %p202 = por %p200, %p201
      %s204 = sadd.s32 %s203, 1
      %p207 = scmp.eq.s32.totalorder %s28, 1
      %p208 = scmp.ne.s32.totalorder %s203, %s205
      %p209 = scmp.eq.s32.totalorder %s28, 0
      %p210 = por %p208, %p209
      %p211 = scmp.ne.s32.totalorder %s203, %s205
      %p212 = scmp.eq.s32.totalorder %s33, 1
      %p213 = por %p211, %p212
      %p214 = scmp.ne.s32.totalorder %s205, %s206
      %p215 = scmp.eq.s32.totalorder %s33, 0
      %p216 = por %p214, %p215
      %p217 = scmp.ne.s32.totalorder %s205, %s206
      %p218 = scmp.eq.s32.totalorder %s34, 1
      %p219 = por %p217, %p218
      %p221 = scmp.ne.s32.totalorder %s206, %s220
      %p222 = scmp.eq.s32.totalorder %s34, 0
      %p223 = por %p221, %p222
      %s225 = sadd.s32 %s224, 1
      %p228 = scmp.eq.s32.totalorder %s28, 1
      %p229 = scmp.ne.s32.totalorder %s224, %s226
      %p230 = scmp.eq.s32.totalorder %s28, 0
      %p231 = por %p229, %p230
      %p232 = scmp.ne.s32.totalorder %s224, %s226
      %p233 = scmp.eq.s32.totalorder %s33, 1
      %p234 = por %p232, %p233
      %p235 = scmp.ne.s32.totalorder %s226, %s227
      %p236 = scmp.eq.s32.totalorder %s33, 0
      %p237 = por %p235, %p236
      %p238 = scmp.ne.s32.totalorder %s226, %s227
      %p239 = scmp.eq.s32.totalorder %s34, 1
      %p240 = por %p238, %p239
      %p242 = scmp.ne.s32.totalorder %s227, %s241
      %p243 = scmp.eq.s32.totalorder %s34, 0
      %p244 = por %p242, %p243
      %s245 = ssub.s32 %s28, %s35
      %p246 = scmp.eq.s32.totalorder %s245, 0
      %s248 = sadd.s32 %s247, 1
      %s249 = scalar_select %p246, %s247, %s248
      %p252 = pneg %p246
      %p253 = scmp.eq.s32.totalorder %s28, 1
      %p254 = por %p252, %p253
      %p255 = scmp.ne.s32.totalorder %s247, %s250
      %p256 = scmp.eq.s32.totalorder %s28, 0
      %p257 = por %p255, %p256
      %p258 = scmp.ne.s32.totalorder %s247, %s250
      %p259 = scmp.eq.s32.totalorder %s33, 1
      %p260 = por %p258, %p259
      %p261 = scmp.ne.s32.totalorder %s250, %s251
      %p262 = scmp.eq.s32.totalorder %s33, 0
      %p263 = por %p261, %p262
      %p264 = scmp.ne.s32.totalorder %s250, %s251
      %p265 = scmp.eq.s32.totalorder %s34, 1
      %p266 = por %p264, %p265
      %p268 = scmp.ne.s32.totalorder %s251, %s267
      %p269 = scmp.eq.s32.totalorder %s34, 0
      %p270 = por %p268, %p269
      %p271 = scmp.le.s32.totalorder 1, %s28
      %p272 = scmp.lt.s32.totalorder %s28, 3
      %p273 = pnand %p271, %p272
      %p274 = pneg %p273
      // Predicated region
      $region9: #{tpu_custom_call.1} parent=5 // pred_check
        _
      $region10: #{tpu_custom_call.1} parent=5 // pred_check_branch
        %276 = sbr.rel (%p273) target = $region12
      $region11: #{tpu_custom_call.1} parent=5 // pred_region
        %s277 = ssub.s32 %s28, 1
        // Predicated region
        $region13: #{tpu_custom_call.1} parent=11 // pred_check
          %p278 = pneg %p153
        $region14: #{tpu_custom_call.1} parent=11 // pred_check_branch
          %280 = sbr.rel (%p278) target = $region16
        $region15: #{tpu_custom_call.1} parent=11 // pred_region
          _
        $region16: #{tpu_custom_call.1} parent=11 // pred_fallthru
          _
        // Predicated region
        $region17: #{tpu_custom_call.1} parent=11 // pred_check
          %p281 = pneg %p174
        $region18: #{tpu_custom_call.1} parent=11 // pred_check_branch
          %283 = sbr.rel (%p281) target = $region20
        $region19: #{tpu_custom_call.1} parent=11 // pred_region
          _
        $region20: #{tpu_custom_call.1} parent=11 // pred_fallthru
          _
        // Predicated region
        $region21: #{tpu_custom_call.1} parent=11 // pred_check
          %p284 = pneg %p195
        $region22: #{tpu_custom_call.1} parent=11 // pred_check_branch
          %286 = sbr.rel (%p284) target = $region24
        $region23: #{tpu_custom_call.1} parent=11 // pred_region
          %s288 = ssub.s32 128, 128
          %289 = vsyncadd [#allocation9], %s288
          %s291 = sshll.u32 [#allocation10], 4
          %s292 = int_to_ptr.vmem [resolvable:$true] %s291
          %294 = dma.hbm_to_vmem [thread:$0]  %s6, 128, %s292, [#allocation9]
        $region24: #{tpu_custom_call.1} parent=11 // pred_fallthru
          _
        // Predicated region
        $region25: #{tpu_custom_call.1} parent=11 // pred_check
          %p295 = pneg %p216
        $region26: #{tpu_custom_call.1} parent=11 // pred_check_branch
          %297 = sbr.rel (%p295) target = $region28
        $region27: #{tpu_custom_call.1} parent=11 // pred_region
          %s299 = ssub.s32 512, 512
          %300 = vsyncadd [#allocation12], %s299
          %s301 = sshll.u32 [#allocation11], 4
          %s302 = int_to_ptr.vmem [resolvable:$true] %s301
          %307 = dma.hbm_to_vmem [thread:$0]  %s7, 512, %s302, [#allocation12], 128, 128, 8
        $region28: #{tpu_custom_call.1} parent=11 // pred_fallthru
          _
        // Predicated region
        $region29: #{tpu_custom_call.1} parent=11 // pred_check
          %p308 = pneg %p237
        $region30: #{tpu_custom_call.1} parent=11 // pred_check_branch
          %310 = sbr.rel (%p308) target = $region32
        $region31: #{tpu_custom_call.1} parent=11 // pred_region
          _
        $region32: #{tpu_custom_call.1} parent=11 // pred_fallthru
          _
      $region12: #{tpu_custom_call.1} parent=5 // pred_fallthru
        _
      %p311 = scmp.lt.s32.totalorder %s28, 2
      // Predicated region
      $region33: #{tpu_custom_call.1} parent=5 // pred_check
        %p312 = pneg %p311
      $region34: #{tpu_custom_call.1} parent=5 // pred_check_branch
        %314 = sbr.rel (%p312) target = $region36
      $region35: #{tpu_custom_call.1} parent=5 // pred_region
        // Predicated region
        $region37: #{tpu_custom_call.1} parent=35 // pred_check
          %p315 = pneg %p48
        $region38: #{tpu_custom_call.1} parent=35 // pred_check_branch
          %317 = sbr.rel (%p315) target = $region40
        $region39: #{tpu_custom_call.1} parent=35 // pred_region
          %s318 = sand.u32 %s38, 1
          %s319 = scalar_lea.sflag [#allocation3], %s318
          %s320 = sand.u32 %s38, 1
          %s321 = smul.addr %s320, 32
          %s322 = scalar_lea.vmem [#allocation2], %s321
          %s323 = smul.u32 4, %s28
          %s325 = ssub.s32 512, 512
          %326 = vsyncadd %s319, %s325
          %s327 = smul.addr %s323, 128
          %s328 = scalar_lea.hbm %s0, %s327
          %s329 = sshll.u32 %s322, 4
          %s330 = int_to_ptr.vmem [resolvable:$true] %s329
          %335 = dma.hbm_to_vmem [thread:$0]  %s328, 512, %s330, %s319, 128, 128, 8
        $region40: #{tpu_custom_call.1} parent=35 // pred_fallthru
          _
        // Predicated region
        $region41: #{tpu_custom_call.1} parent=35 // pred_check
          %p336 = pneg %p74
        $region42: #{tpu_custom_call.1} parent=35 // pred_check_branch
          %338 = sbr.rel (%p336) target = $region44
        $region43: #{tpu_custom_call.1} parent=35 // pred_region
          %s339 = sand.u32 %s28, 1
          %s340 = scalar_lea.sflag [#allocation6], %s339
          %s341 = sand.u32 %s64, 1
          %s342 = smul.addr %s341, 32
          %s343 = scalar_lea.vmem [#allocation5], %s342
          %s344 = smul.u32 4, %s28
          %s346 = ssub.s32 512, 512
          %347 = vsyncadd %s340, %s346
          %s348 = smul.addr %s344, 128
          %s349 = scalar_lea.hbm %s1, %s348
          %s350 = sshll.u32 %s343, 4
          %s351 = int_to_ptr.vmem [resolvable:$true] %s350
          %356 = dma.hbm_to_vmem [thread:$0]  %s349, 512, %s351, %s340, 128, 128, 8
        $region44: #{tpu_custom_call.1} parent=35 // pred_fallthru
          _
        // Predicated region
        $region45: #{tpu_custom_call.1} parent=35 // pred_check
          %p357 = pneg %p100
        $region46: #{tpu_custom_call.1} parent=35 // pred_check_branch
          %359 = sbr.rel (%p357) target = $region48
        $region47: #{tpu_custom_call.1} parent=35 // pred_region
          %s360 = sand.u32 %s28, 1
          %s361 = scalar_lea.sflag [#allocation6], %s360
          %s362 = sand.u32 %s90, 1
          %s363 = smul.addr %s362, 32
          %s364 = scalar_lea.vmem [#allocation7], %s363
          %s365 = smul.u32 4, %s28
          %s367 = ssub.s32 512, 512
          %368 = vsyncadd %s361, %s367
          %s369 = smul.addr %s365, 128
          %s370 = scalar_lea.hbm %s2, %s369
          %s371 = sshll.u32 %s364, 4
          %s372 = int_to_ptr.vmem [resolvable:$true] %s371
          %377 = dma.hbm_to_vmem [thread:$0]  %s370, 512, %s372, %s361, 128, 128, 8
        $region48: #{tpu_custom_call.1} parent=35 // pred_fallthru
          _
        // Predicated region
        $region49: #{tpu_custom_call.1} parent=35 // pred_check
          %p378 = pneg %p126
        $region50: #{tpu_custom_call.1} parent=35 // pred_check_branch
          %380 = sbr.rel (%p378) target = $region52
        $region51: #{tpu_custom_call.1} parent=35 // pred_region
          %s381 = sand.u32 %s28, 1
          %s382 = scalar_lea.sflag [#allocation9], %s381
          %s383 = sand.u32 %s116, 1
          %s384 = smul.addr %s383, 2
          %s385 = scalar_lea.vmem [#allocation8], %s384
          %s387 = ssub.s32 32, 32
          %388 = vsyncadd %s382, %s387
          %s389 = smul.addr %s28, 32
          %s390 = scalar_lea.hbm %s3, %s389
          %s392 = sshll.u32 %s385, 4
          %s393 = int_to_ptr.vmem [resolvable:$true] %s392
          %395 = dma.hbm_to_vmem [thread:$0]  %s390, 32, %s393, %s382
        $region52: #{tpu_custom_call.1} parent=35 // pred_fallthru
          _
      $region36: #{tpu_custom_call.1} parent=5 // pred_fallthru
        _
      %p396 = scmp.le.s32.totalorder 1, %s28
      %p397 = scmp.lt.s32.totalorder %s28, 3
      %p398 = pnand %p396, %p397
      %p399 = pneg %p398
      // Predicated region
      $region53: #{tpu_custom_call.1} parent=5 // pred_check
        _
      $region54: #{tpu_custom_call.1} parent=5 // pred_check_branch
        %401 = sbr.rel (%p398) target = $region56
      $region55: #{tpu_custom_call.1} parent=5 // pred_region
        %s402 = ssub.s32 %s28, 1
        %s403 = sand.u32 %s41, 1
        %s404 = scalar_lea.sflag [#allocation3], %s403
        %s405 = sand.u32 %s41, 1
        %s406 = smul.addr %s405, 32
        %s407 = scalar_lea.vmem [#allocation2], %s406
        // Predicated region
        $region57: #{tpu_custom_call.1} parent=55 // pred_check
          %p408 = pneg %p54
        $region58: #{tpu_custom_call.1} parent=55 // pred_check_branch
          %410 = sbr.rel (%p408) target = $region60
        $region59: #{tpu_custom_call.1} parent=55 // pred_region
          %411 = dma.done %s404, 512
        $region60: #{tpu_custom_call.1} parent=55 // pred_fallthru
          _
        %s412 = sand.u32 %s33, 1
        %s413 = scalar_lea.sflag [#allocation6], %s412
        %s414 = sand.u32 %s67, 1
        %s415 = smul.addr %s414, 32
        %s416 = scalar_lea.vmem [#allocation5], %s415
        // Predicated region
        $region61: #{tpu_custom_call.1} parent=55 // pred_check
          %p417 = pneg %p80
        $region62: #{tpu_custom_call.1} parent=55 // pred_check_branch
          %419 = sbr.rel (%p417) target = $region64
        $region63: #{tpu_custom_call.1} parent=55 // pred_region
          %420 = dma.done %s413, 512
        $region64: #{tpu_custom_call.1} parent=55 // pred_fallthru
          _
        %s421 = sand.u32 %s33, 1
        %s422 = scalar_lea.sflag [#allocation6], %s421
        %s423 = sand.u32 %s93, 1
        %s424 = smul.addr %s423, 32
        %s425 = scalar_lea.vmem [#allocation7], %s424
        // Predicated region
        $region65: #{tpu_custom_call.1} parent=55 // pred_check
          %p426 = pneg %p106
        $region66: #{tpu_custom_call.1} parent=55 // pred_check_branch
          %428 = sbr.rel (%p426) target = $region68
        $region67: #{tpu_custom_call.1} parent=55 // pred_region
          %429 = dma.done %s422, 512
        $region68: #{tpu_custom_call.1} parent=55 // pred_fallthru
          _
        %s430 = sand.u32 %s33, 1
        %s431 = scalar_lea.sflag [#allocation9], %s430
        %s432 = sand.u32 %s119, 1
        %s433 = smul.addr %s432, 2
        %s434 = scalar_lea.vmem [#allocation8], %s433
        // Predicated region
        $region69: #{tpu_custom_call.1} parent=55 // pred_check
          %p435 = pneg %p132
        $region70: #{tpu_custom_call.1} parent=55 // pred_check_branch
          %437 = sbr.rel (%p435) target = $region72
        $region71: #{tpu_custom_call.1} parent=55 // pred_region
          %438 = dma.done %s431, 32
        $region72: #{tpu_custom_call.1} parent=55 // pred_fallthru
          _
        // Predicated region
        $region73: #{tpu_custom_call.1} parent=55 // pred_check
          %p439 = pneg %p195
        $region74: #{tpu_custom_call.1} parent=55 // pred_check_branch
          %441 = sbr.rel (%p439) target = $region76
        $region75: #{tpu_custom_call.1} parent=55 // pred_region
          %442 = dma.done [#allocation9], 128
        $region76: #{tpu_custom_call.1} parent=55 // pred_fallthru
          _
        // Predicated region
        $region77: #{tpu_custom_call.1} parent=55 // pred_check
          %p443 = pneg %p216
        $region78: #{tpu_custom_call.1} parent=55 // pred_check_branch
          %445 = sbr.rel (%p443) target = $region80
        $region79: #{tpu_custom_call.1} parent=55 // pred_region
          %446 = dma.done [#allocation12], 512
        $region80: #{tpu_custom_call.1} parent=55 // pred_fallthru
          _
        %s447 = sand.u32 %s41, 1
        %s448 = scalar_lea.sflag [#allocation3], %s447
        %s449 = sand.u32 %s41, 1
        %s450 = smul.addr %s449, 32
        %s451 = scalar_lea.vmem [#allocation2], %s450
        %p452 = pneg %p54
        %p453 = pneg %p51
        %s454 = sand.u32 %s33, 1
        %s455 = scalar_lea.sflag [#allocation6], %s454
        %s456 = sand.u32 %s67, 1
        %s457 = smul.addr %s456, 32
        %s458 = scalar_lea.vmem [#allocation5], %s457
        %p459 = pneg %p80
        %p460 = pneg %p77
        %s461 = sand.u32 %s33, 1
        %s462 = scalar_lea.sflag [#allocation6], %s461
        %s463 = sand.u32 %s93, 1
        %s464 = smul.addr %s463, 32
        %s465 = scalar_lea.vmem [#allocation7], %s464
        %p466 = pneg %p106
        %p467 = pneg %p103
        %s468 = sand.u32 %s33, 1
        %s469 = scalar_lea.sflag [#allocation9], %s468
        %s470 = sand.u32 %s119, 1
        %s471 = smul.addr %s470, 2
        %s472 = scalar_lea.vmem [#allocation8], %s471
        %p473 = pneg %p132
        %p474 = pneg %p129
        %p475 = pneg %p153
        %p476 = pneg %p150
        %p477 = pneg %p174
        %p478 = pneg %p171
        %p479 = pneg %p195
        %p480 = pneg %p192
        %p481 = pneg %p216
        %p482 = pneg %p213
        %p483 = pneg %p237
        %p484 = pneg %p234
        %p485 = pneg %p263
        %p486 = pneg %p260
        %s487 = sand.u32 %s250, 1
        %s488 = scalar_lea.sflag [#allocation4], %s487
        %s489 = sand.u32 %s250, 1
        %s490 = smul.addr %s489, 8
        %s491 = scalar_lea.vmem [#allocation13], %s490
        %s492 = smul.u32 4, %s33
        %s493 = smul.u32 4, %s33
        %s494 = smul.u32 4, %s33
        %v495 = vld [vmem:[%s425] sm:$0xff]
        %v496 = vld [vmem:[%s425 + $0x8] sm:$0xff]
        %v497 = vld [vmem:[%s425 + $0x10] sm:$0xff]
        %v498 = vld [vmem:[%s425 + $0x18] sm:$0xff]
        %v499 = vld [vmem:[#allocation10] sm:$0xff]
        %vm500 = vcmask 64512
        %v502 = vsel %vm500, %v495, 0
        %v505 = vsel %vm500, %v496, 0
        %v508 = vsel %vm500, %v497, 0
        %v511 = vsel %vm500, %v498, 0
        %513 = vmatprep.subr.mxu0 0.0
        %514 = vmatpush1.msra.mxu0 %v499
        %515 = vmatprep.subr.mxu0 0.0
        %516 = vmatpush1.msra.mxu0 0.0
        %517 = vmatprep.subr.mxu0 0.0
        %518 = vmatpush1.msra.mxu0 0.0
        %519 = vmatprep.subr.mxu0 0.0
        %520 = vmatpush1.msra.mxu0 0.0
        %521 = vmatprep.subr.mxu0 0.0
        %522 = vmatpush1.msra.mxu0 0.0
        %523 = vmatprep.subr.mxu0 0.0
        %524 = vmatpush1.msra.mxu0 0.0
        %525 = vmatprep.subr.mxu0 0.0
        %526 = vmatpush1.msra.mxu0 0.0
        %527 = vmatprep.subr.mxu0 0.0
        %528 = vmatpush1.msra.mxu0 0.0
        %529 = vmatprep.subr.mxu0 0.0
        %530 = vmatpush1.msra.mxu0 0.0
        %531 = vmatprep.subr.mxu0 0.0
        %532 = vmatpush1.msra.mxu0 0.0
        %533 = vmatprep.subr.mxu0 0.0
        %534 = vmatpush1.msra.mxu0 0.0
        %535 = vmatprep.subr.mxu0 0.0
        %536 = vmatpush1.msra.mxu0 0.0
        %537 = vmatprep.subr.mxu0 0.0
        %538 = vmatpush1.msra.mxu0 0.0
        %539 = vmatprep.subr.mxu0 0.0
        %540 = vmatpush1.msra.mxu0 0.0
        %541 = vmatprep.subr.mxu0 0.0
        %542 = vmatpush1.msra.mxu0 0.0
        %543 = vmatprep.subr.mxu0 0.0
        %544 = vmatpush1.msra.mxu0 0.0
        %545 = vmatprep.subr.mxu0 0.0
        %546 = vmatpush1.msra.mxu0 0.0
        %547 = vmatprep.subr.mxu0 0.0
        %548 = vmatpush1.msra.mxu0 0.0
        %549 = vmatprep.subr.mxu0 0.0
        %550 = vmatpush1.msra.mxu0 0.0
        %551 = vmatprep.subr.mxu0 0.0
        %552 = vmatpush1.msra.mxu0 0.0
        %553 = vmatprep.subr.mxu0 0.0
        %554 = vmatpush1.msra.mxu0 0.0
        %555 = vmatprep.subr.mxu0 0.0
        %556 = vmatpush1.msra.mxu0 0.0
        %557 = vmatprep.subr.mxu0 0.0
        %558 = vmatpush1.msra.mxu0 0.0
        %559 = vmatprep.subr.mxu0 0.0
        %560 = vmatpush1.msra.mxu0 0.0
        %561 = vmatprep.subr.mxu0 0.0
        %562 = vmatpush1.msra.mxu0 0.0
        %563 = vmatprep.subr.mxu0 0.0
        %564 = vmatpush1.msra.mxu0 0.0
        %565 = vmatprep.subr.mxu0 0.0
        %566 = vmatpush1.msra.mxu0 0.0
        %567 = vmatprep.subr.mxu0 0.0
        %568 = vmatpush1.msra.mxu0 0.0
        %569 = vmatprep.subr.mxu0 0.0
        %570 = vmatpush1.msra.mxu0 0.0
        %571 = vmatprep.subr.mxu0 0.0
        %572 = vmatpush1.msra.mxu0 0.0
        %573 = vmatprep.subr.mxu0 0.0
        %574 = vmatpush1.msra.mxu0 0.0
        %575 = vmatprep.subr.mxu0 0.0
        %576 = vmatpush1.msra.mxu0 0.0
        %577 = vmatprep.mubr.f32.mxu0 0.0
        %578 = vmatmul.mubr.f32.gmra.mrb[0].mxu0 %v502
        %v579 = vpop.f32.mrb[0].mxu0
        %v580 = vadd.f32 0.0, %v579
        %v581 = vpop.f32.mrb[0].mxu0
        %582 = vmatprep.mubr.f32.mxu0 0.0
        %583 = vmatmul.mubr.f32.gmra.mrb[0].mxu0 %v505
        %v584 = vpop.f32.mrb[0].mxu0
        %v585 = vadd.f32 0.0, %v584
        %v586 = vpop.f32.mrb[0].mxu0
        %587 = vmatprep.mubr.f32.mxu0 0.0
        %588 = vmatmul.mubr.f32.gmra.mrb[0].mxu0 %v508
        %v589 = vpop.f32.mrb[0].mxu0
        %v590 = vadd.f32 0.0, %v589
        %v591 = vpop.f32.mrb[0].mxu0
        %592 = vmatprep.mubr.f32.mxu0 0.0
        %593 = vmatmul.mubr.f32.gmra.mrb[0].mxu0 %v511
        %v594 = vpop.f32.mrb[0].mxu0
        %v595 = vadd.f32 0.0, %v594
        %v596 = vpop.f32.mrb[0].mxu0
        %597 = vdwg.mxu0
        %v598 = vld [vmem:[%s416] sm:$0xff]
        %v599 = vld [vmem:[%s416 + $0x8] sm:$0xff]
        %v600 = vld [vmem:[%s416 + $0x10] sm:$0xff]
        %v601 = vld [vmem:[%s416 + $0x18] sm:$0xff]
        %v602 = vld [vmem:[%s5] sm:$0xff]
        %v604 = vsel %vm500, %v598, 0
        %v607 = vsel %vm500, %v599, 0
        %v610 = vsel %vm500, %v600, 0
        %v613 = vsel %vm500, %v601, 0
        %615 = vmatprep.subr.mxu0 0.0
        %616 = vmatpush1.msra.mxu0 %v602
        %617 = vmatprep.subr.mxu0 0.0
        %618 = vmatpush1.msra.mxu0 0.0
        %619 = vmatprep.subr.mxu0 0.0
        %620 = vmatpush1.msra.mxu0 0.0
        %621 = vmatprep.subr.mxu0 0.0
        %622 = vmatpush1.msra.mxu0 0.0
        %623 = vmatprep.subr.mxu0 0.0
        %624 = vmatpush1.msra.mxu0 0.0
        %625 = vmatprep.subr.mxu0 0.0
        %626 = vmatpush1.msra.mxu0 0.0
        %627 = vmatprep.subr.mxu0 0.0
        %628 = vmatpush1.msra.mxu0 0.0
        %629 = vmatprep.subr.mxu0 0.0
        %630 = vmatpush1.msra.mxu0 0.0
        %631 = vmatprep.subr.mxu0 0.0
        %632 = vmatpush1.msra.mxu0 0.0
        %633 = vmatprep.subr.mxu0 0.0
        %634 = vmatpush1.msra.mxu0 0.0
        %635 = vmatprep.subr.mxu0 0.0
        %636 = vmatpush1.msra.mxu0 0.0
        %637 = vmatprep.subr.mxu0 0.0
        %638 = vmatpush1.msra.mxu0 0.0
        %639 = vmatprep.subr.mxu0 0.0
        %640 = vmatpush1.msra.mxu0 0.0
        %641 = vmatprep.subr.mxu0 0.0
        %642 = vmatpush1.msra.mxu0 0.0
        %643 = vmatprep.subr.mxu0 0.0
        %644 = vmatpush1.msra.mxu0 0.0
        %645 = vmatprep.subr.mxu0 0.0
        %646 = vmatpush1.msra.mxu0 0.0
        %647 = vmatprep.subr.mxu0 0.0
        %648 = vmatpush1.msra.mxu0 0.0
        %649 = vmatprep.subr.mxu0 0.0
        %650 = vmatpush1.msra.mxu0 0.0
        %651 = vmatprep.subr.mxu0 0.0
        %652 = vmatpush1.msra.mxu0 0.0
        %653 = vmatprep.subr.mxu0 0.0
        %654 = vmatpush1.msra.mxu0 0.0
        %655 = vmatprep.subr.mxu0 0.0
        %656 = vmatpush1.msra.mxu0 0.0
        %657 = vmatprep.subr.mxu0 0.0
        %658 = vmatpush1.msra.mxu0 0.0
        %659 = vmatprep.subr.mxu0 0.0
        %660 = vmatpush1.msra.mxu0 0.0
        %661 = vmatprep.subr.mxu0 0.0
        %662 = vmatpush1.msra.mxu0 0.0
        %663 = vmatprep.subr.mxu0 0.0
        %664 = vmatpush1.msra.mxu0 0.0
        %665 = vmatprep.subr.mxu0 0.0
        %666 = vmatpush1.msra.mxu0 0.0
        %667 = vmatprep.subr.mxu0 0.0
        %668 = vmatpush1.msra.mxu0 0.0
        %669 = vmatprep.subr.mxu0 0.0
        %670 = vmatpush1.msra.mxu0 0.0
        %671 = vmatprep.subr.mxu0 0.0
        %672 = vmatpush1.msra.mxu0 0.0
        %673 = vmatprep.subr.mxu0 0.0
        %674 = vmatpush1.msra.mxu0 0.0
        %675 = vmatprep.subr.mxu0 0.0
        %676 = vmatpush1.msra.mxu0 0.0
        %677 = vmatprep.subr.mxu0 0.0
        %678 = vmatpush1.msra.mxu0 0.0
        %679 = vmatprep.mubr.f32.mxu0 0.0
        %680 = vmatmul.mubr.f32.gmra.mrb[0].mxu0 %v604
        %v681 = vpop.f32.mrb[0].mxu0
        %v682 = vadd.f32 0.0, %v681
        %v683 = vpop.f32.mrb[0].mxu0
        %684 = vmatprep.mubr.f32.mxu0 0.0
        %685 = vmatmul.mubr.f32.gmra.mrb[0].mxu0 %v607
        %v686 = vpop.f32.mrb[0].mxu0
        %v687 = vadd.f32 0.0, %v686
        %v688 = vpop.f32.mrb[0].mxu0
        %689 = vmatprep.mubr.f32.mxu0 0.0
        %690 = vmatmul.mubr.f32.gmra.mrb[0].mxu0 %v610
        %v691 = vpop.f32.mrb[0].mxu0
        %v692 = vadd.f32 0.0, %v691
        %v693 = vpop.f32.mrb[0].mxu0
        %694 = vmatprep.mubr.f32.mxu0 0.0
        %695 = vmatmul.mubr.f32.gmra.mrb[0].mxu0 %v613
        %v696 = vpop.f32.mrb[0].mxu0
        %v697 = vadd.f32 0.0, %v696
        %v698 = vpop.f32.mrb[0].mxu0
        %699 = vdwg.mxu0
        %v700 = vld [vmem:[%s407] sm:$0xff]
        %v701 = vld [vmem:[%s407 + $0x8] sm:$0xff]
        %v702 = vld [vmem:[%s407 + $0x10] sm:$0xff]
        %v703 = vld [vmem:[%s407 + $0x18] sm:$0xff]
        %v704 = vld [vmem:[%s4] sm:$0xff]
        %v706 = vsel %vm500, %v700, 0
        %v709 = vsel %vm500, %v701, 0
        %v712 = vsel %vm500, %v702, 0
        %v715 = vsel %vm500, %v703, 0
        %717 = vmatprep.subr.mxu0 0.0
        %718 = vmatpush1.msra.mxu0 %v704
        %719 = vmatprep.subr.mxu0 0.0
        %720 = vmatpush1.msra.mxu0 0.0
        %721 = vmatprep.subr.mxu0 0.0
        %722 = vmatpush1.msra.mxu0 0.0
        %723 = vmatprep.subr.mxu0 0.0
        %724 = vmatpush1.msra.mxu0 0.0
        %725 = vmatprep.subr.mxu0 0.0
        %726 = vmatpush1.msra.mxu0 0.0
        %727 = vmatprep.subr.mxu0 0.0
        %728 = vmatpush1.msra.mxu0 0.0
        %729 = vmatprep.subr.mxu0 0.0
        %730 = vmatpush1.msra.mxu0 0.0
        %731 = vmatprep.subr.mxu0 0.0
        %732 = vmatpush1.msra.mxu0 0.0
        %733 = vmatprep.subr.mxu0 0.0
        %734 = vmatpush1.msra.mxu0 0.0
        %735 = vmatprep.subr.mxu0 0.0
        %736 = vmatpush1.msra.mxu0 0.0
        %737 = vmatprep.subr.mxu0 0.0
        %738 = vmatpush1.msra.mxu0 0.0
        %739 = vmatprep.subr.mxu0 0.0
        %740 = vmatpush1.msra.mxu0 0.0
        %741 = vmatprep.subr.mxu0 0.0
        %742 = vmatpush1.msra.mxu0 0.0
        %743 = vmatprep.subr.mxu0 0.0
        %744 = vmatpush1.msra.mxu0 0.0
        %745 = vmatprep.subr.mxu0 0.0
        %746 = vmatpush1.msra.mxu0 0.0
        %747 = vmatprep.subr.mxu0 0.0
        %748 = vmatpush1.msra.mxu0 0.0
        %749 = vmatprep.subr.mxu0 0.0
        %750 = vmatpush1.msra.mxu0 0.0
        %751 = vmatprep.subr.mxu0 0.0
        %752 = vmatpush1.msra.mxu0 0.0
        %753 = vmatprep.subr.mxu0 0.0
        %754 = vmatpush1.msra.mxu0 0.0
        %755 = vmatprep.subr.mxu0 0.0
        %756 = vmatpush1.msra.mxu0 0.0
        %757 = vmatprep.subr.mxu0 0.0
        %758 = vmatpush1.msra.mxu0 0.0
        %759 = vmatprep.subr.mxu0 0.0
        %760 = vmatpush1.msra.mxu0 0.0
        %761 = vmatprep.subr.mxu0 0.0
        %762 = vmatpush1.msra.mxu0 0.0
        %763 = vmatprep.subr.mxu0 0.0
        %764 = vmatpush1.msra.mxu0 0.0
        %765 = vmatprep.subr.mxu0 0.0
        %766 = vmatpush1.msra.mxu0 0.0
        %767 = vmatprep.subr.mxu0 0.0
        %768 = vmatpush1.msra.mxu0 0.0
        %769 = vmatprep.subr.mxu0 0.0
        %770 = vmatpush1.msra.mxu0 0.0
        %771 = vmatprep.subr.mxu0 0.0
        %772 = vmatpush1.msra.mxu0 0.0
        %773 = vmatprep.subr.mxu0 0.0
        %774 = vmatpush1.msra.mxu0 0.0
        %775 = vmatprep.subr.mxu0 0.0
        %776 = vmatpush1.msra.mxu0 0.0
        %777 = vmatprep.subr.mxu0 0.0
        %778 = vmatpush1.msra.mxu0 0.0
        %779 = vmatprep.subr.mxu0 0.0
        %780 = vmatpush1.msra.mxu0 0.0
        %781 = vmatprep.mubr.f32.mxu0 0.0
        %782 = vmatmul.mubr.f32.gmra.mrb[0].mxu0 %v706
        %v783 = vpop.f32.mrb[0].mxu0
        %v784 = vadd.f32 0.0, %v783
        %v785 = vpop.f32.mrb[0].mxu0
        %786 = vmatprep.mubr.f32.mxu0 0.0
        %787 = vmatmul.mubr.f32.gmra.mrb[0].mxu0 %v709
        %v788 = vpop.f32.mrb[0].mxu0
        %v789 = vadd.f32 0.0, %v788
        %v790 = vpop.f32.mrb[0].mxu0
        %791 = vmatprep.mubr.f32.mxu0 0.0
        %792 = vmatmul.mubr.f32.gmra.mrb[0].mxu0 %v712
        %v793 = vpop.f32.mrb[0].mxu0
        %v794 = vadd.f32 0.0, %v793
        %v795 = vpop.f32.mrb[0].mxu0
        %796 = vmatprep.mubr.f32.mxu0 0.0
        %797 = vmatmul.mubr.f32.gmra.mrb[0].mxu0 %v715
        %v798 = vpop.f32.mrb[0].mxu0
        %v799 = vadd.f32 0.0, %v798
        %v800 = vpop.f32.mrb[0].mxu0
        %801 = vdwg.mxu0
        %v803 = vsel %vm500, %v580, 0
        %v806 = vsel %vm500, %v682, 0
        %808 = vmatprep.subr.mxu0 0.0
        %809 = vmatpush1.xpose.msra.mxu0 %v806
        %810 = vmatprep.subr.mxu0 0.0
        %811 = vmatpush1.xpose.msra.mxu0 0.0
        %812 = vmatprep.subr.mxu0 0.0
        %813 = vmatpush1.xpose.msra.mxu0 0.0
        %814 = vmatprep.subr.mxu0 0.0
        %815 = vmatpush1.xpose.msra.mxu0 0.0
        %816 = vmatprep.subr.mxu0 0.0
        %817 = vmatpush1.xpose.msra.mxu0 0.0
        %818 = vmatprep.subr.mxu0 0.0
        %819 = vmatpush1.xpose.msra.mxu0 0.0
        %820 = vmatprep.subr.mxu0 0.0
        %821 = vmatpush1.xpose.msra.mxu0 0.0
        %822 = vmatprep.subr.mxu0 0.0
        %823 = vmatpush1.xpose.msra.mxu0 0.0
        %824 = vmatprep.subr.mxu0 0.0
        %825 = vmatpush1.xpose.msra.mxu0 0.0
        %826 = vmatprep.subr.mxu0 0.0
        %827 = vmatpush1.xpose.msra.mxu0 0.0
        %828 = vmatprep.subr.mxu0 0.0
        %829 = vmatpush1.xpose.msra.mxu0 0.0
        %830 = vmatprep.subr.mxu0 0.0
        %831 = vmatpush1.xpose.msra.mxu0 0.0
        %832 = vmatprep.subr.mxu0 0.0
        %833 = vmatpush1.xpose.msra.mxu0 0.0
        %834 = vmatprep.subr.mxu0 0.0
        %835 = vmatpush1.xpose.msra.mxu0 0.0
        %836 = vmatprep.subr.mxu0 0.0
        %837 = vmatpush1.xpose.msra.mxu0 0.0
        %838 = vmatprep.subr.mxu0 0.0
        %839 = vmatpush1.xpose.msra.mxu0 0.0
        %840 = vmatprep.subr.mxu0 0.0
        %841 = vmatpush1.xpose.msra.mxu0 0.0
        %842 = vmatprep.subr.mxu0 0.0
        %843 = vmatpush1.xpose.msra.mxu0 0.0
        %844 = vmatprep.subr.mxu0 0.0
        %845 = vmatpush1.xpose.msra.mxu0 0.0
        %846 = vmatprep.subr.mxu0 0.0
        %847 = vmatpush1.xpose.msra.mxu0 0.0
        %848 = vmatprep.subr.mxu0 0.0
        %849 = vmatpush1.xpose.msra.mxu0 0.0
        %850 = vmatprep.subr.mxu0 0.0
        %851 = vmatpush1.xpose.msra.mxu0 0.0
        %852 = vmatprep.subr.mxu0 0.0
        %853 = vmatpush1.xpose.msra.mxu0 0.0
        %854 = vmatprep.subr.mxu0 0.0
        %855 = vmatpush1.xpose.msra.mxu0 0.0
        %856 = vmatprep.subr.mxu0 0.0
        %857 = vmatpush1.xpose.msra.mxu0 0.0
        %858 = vmatprep.subr.mxu0 0.0
        %859 = vmatpush1.xpose.msra.mxu0 0.0
        %860 = vmatprep.subr.mxu0 0.0
        %861 = vmatpush1.xpose.msra.mxu0 0.0
        %862 = vmatprep.subr.mxu0 0.0
        %863 = vmatpush1.xpose.msra.mxu0 0.0
        %864 = vmatprep.subr.mxu0 0.0
        %865 = vmatpush1.xpose.msra.mxu0 0.0
        %866 = vmatprep.subr.mxu0 0.0
        %867 = vmatpush1.xpose.msra.mxu0 0.0
        %868 = vmatprep.subr.mxu0 0.0
        %869 = vmatpush1.xpose.msra.mxu0 0.0
        %870 = vmatprep.subr.mxu0 0.0
        %871 = vmatpush1.xpose.msra.mxu0 0.0
        %872 = vmatprep.mubr.f32.mxu0 0.0
        %873 = vmatmul.mubr.f32.gmra.mrb[0].mxu0 %v803
        %v874 = vpop.f32.mrb[0].mxu0
        %v875 = vadd.f32 0.0, %v874
        %v876 = vpop.f32.mrb[0].mxu0
        %877 = vdwg.mxu0
        %v879 = vsel %vm500, %v585, 0
        %v882 = vsel %vm500, %v687, 0
        %884 = vmatprep.subr.mxu0 0.0
        %885 = vmatpush1.xpose.msra.mxu0 %v882
        %886 = vmatprep.subr.mxu0 0.0
        %887 = vmatpush1.xpose.msra.mxu0 0.0
        %888 = vmatprep.subr.mxu0 0.0
        %889 = vmatpush1.xpose.msra.mxu0 0.0
        %890 = vmatprep.subr.mxu0 0.0
        %891 = vmatpush1.xpose.msra.mxu0 0.0
        %892 = vmatprep.subr.mxu0 0.0
        %893 = vmatpush1.xpose.msra.mxu0 0.0
        %894 = vmatprep.subr.mxu0 0.0
        %895 = vmatpush1.xpose.msra.mxu0 0.0
        %896 = vmatprep.subr.mxu0 0.0
        %897 = vmatpush1.xpose.msra.mxu0 0.0
        %898 = vmatprep.subr.mxu0 0.0
        %899 = vmatpush1.xpose.msra.mxu0 0.0
        %900 = vmatprep.subr.mxu0 0.0
        %901 = vmatpush1.xpose.msra.mxu0 0.0
        %902 = vmatprep.subr.mxu0 0.0
        %903 = vmatpush1.xpose.msra.mxu0 0.0
        %904 = vmatprep.subr.mxu0 0.0
        %905 = vmatpush1.xpose.msra.mxu0 0.0
        %906 = vmatprep.subr.mxu0 0.0
        %907 = vmatpush1.xpose.msra.mxu0 0.0
        %908 = vmatprep.subr.mxu0 0.0
        %909 = vmatpush1.xpose.msra.mxu0 0.0
        %910 = vmatprep.subr.mxu0 0.0
        %911 = vmatpush1.xpose.msra.mxu0 0.0
        %912 = vmatprep.subr.mxu0 0.0
        %913 = vmatpush1.xpose.msra.mxu0 0.0
        %914 = vmatprep.subr.mxu0 0.0
        %915 = vmatpush1.xpose.msra.mxu0 0.0
        %916 = vmatprep.subr.mxu0 0.0
        %917 = vmatpush1.xpose.msra.mxu0 0.0
        %918 = vmatprep.subr.mxu0 0.0
        %919 = vmatpush1.xpose.msra.mxu0 0.0
        %920 = vmatprep.subr.mxu0 0.0
        %921 = vmatpush1.xpose.msra.mxu0 0.0
        %922 = vmatprep.subr.mxu0 0.0
        %923 = vmatpush1.xpose.msra.mxu0 0.0
        %924 = vmatprep.subr.mxu0 0.0
        %925 = vmatpush1.xpose.msra.mxu0 0.0
        %926 = vmatprep.subr.mxu0 0.0
        %927 = vmatpush1.xpose.msra.mxu0 0.0
        %928 = vmatprep.subr.mxu0 0.0
        %929 = vmatpush1.xpose.msra.mxu0 0.0
        %930 = vmatprep.subr.mxu0 0.0
        %931 = vmatpush1.xpose.msra.mxu0 0.0
        %932 = vmatprep.subr.mxu0 0.0
        %933 = vmatpush1.xpose.msra.mxu0 0.0
        %934 = vmatprep.subr.mxu0 0.0
        %935 = vmatpush1.xpose.msra.mxu0 0.0
        %936 = vmatprep.subr.mxu0 0.0
        %937 = vmatpush1.xpose.msra.mxu0 0.0
        %938 = vmatprep.subr.mxu0 0.0
        %939 = vmatpush1.xpose.msra.mxu0 0.0
        %940 = vmatprep.subr.mxu0 0.0
        %941 = vmatpush1.xpose.msra.mxu0 0.0
        %942 = vmatprep.subr.mxu0 0.0
        %943 = vmatpush1.xpose.msra.mxu0 0.0
        %944 = vmatprep.subr.mxu0 0.0
        %945 = vmatpush1.xpose.msra.mxu0 0.0
        %946 = vmatprep.subr.mxu0 0.0
        %947 = vmatpush1.xpose.msra.mxu0 0.0
        %948 = vmatprep.mubr.f32.mxu0 0.0
        %949 = vmatmul.mubr.f32.gmra.mrb[0].mxu0 %v879
        %v950 = vpop.f32.mrb[0].mxu0
        %v951 = vadd.f32 0.0, %v950
        %v952 = vpop.f32.mrb[0].mxu0
        %953 = vdwg.mxu0
        %v955 = vsel %vm500, %v590, 0
        %v958 = vsel %vm500, %v692, 0
        %960 = vmatprep.subr.mxu0 0.0
        %961 = vmatpush1.xpose.msra.mxu0 %v958
        %962 = vmatprep.subr.mxu0 0.0
        %963 = vmatpush1.xpose.msra.mxu0 0.0
        %964 = vmatprep.subr.mxu0 0.0
        %965 = vmatpush1.xpose.msra.mxu0 0.0
        %966 = vmatprep.subr.mxu0 0.0
        %967 = vmatpush1.xpose.msra.mxu0 0.0
        %968 = vmatprep.subr.mxu0 0.0
        %969 = vmatpush1.xpose.msra.mxu0 0.0
        %970 = vmatprep.subr.mxu0 0.0
        %971 = vmatpush1.xpose.msra.mxu0 0.0
        %972 = vmatprep.subr.mxu0 0.0
        %973 = vmatpush1.xpose.msra.mxu0 0.0
        %974 = vmatprep.subr.mxu0 0.0
        %975 = vmatpush1.xpose.msra.mxu0 0.0
        %976 = vmatprep.subr.mxu0 0.0
        %977 = vmatpush1.xpose.msra.mxu0 0.0
        %978 = vmatprep.subr.mxu0 0.0
        %979 = vmatpush1.xpose.msra.mxu0 0.0
        %980 = vmatprep.subr.mxu0 0.0
        %981 = vmatpush1.xpose.msra.mxu0 0.0
        %982 = vmatprep.subr.mxu0 0.0
        %983 = vmatpush1.xpose.msra.mxu0 0.0
        %984 = vmatprep.subr.mxu0 0.0
        %985 = vmatpush1.xpose.msra.mxu0 0.0
        %986 = vmatprep.subr.mxu0 0.0
        %987 = vmatpush1.xpose.msra.mxu0 0.0
        %988 = vmatprep.subr.mxu0 0.0
        %989 = vmatpush1.xpose.msra.mxu0 0.0
        %990 = vmatprep.subr.mxu0 0.0
        %991 = vmatpush1.xpose.msra.mxu0 0.0
        %992 = vmatprep.subr.mxu0 0.0
        %993 = vmatpush1.xpose.msra.mxu0 0.0
        %994 = vmatprep.subr.mxu0 0.0
        %995 = vmatpush1.xpose.msra.mxu0 0.0
        %996 = vmatprep.subr.mxu0 0.0
        %997 = vmatpush1.xpose.msra.mxu0 0.0
        %998 = vmatprep.subr.mxu0 0.0
        %999 = vmatpush1.xpose.msra.mxu0 0.0
        %1000 = vmatprep.subr.mxu0 0.0
        %1001 = vmatpush1.xpose.msra.mxu0 0.0
        %1002 = vmatprep.subr.mxu0 0.0
        %1003 = vmatpush1.xpose.msra.mxu0 0.0
        %1004 = vmatprep.subr.mxu0 0.0
        %1005 = vmatpush1.xpose.msra.mxu0 0.0
        %1006 = vmatprep.subr.mxu0 0.0
        %1007 = vmatpush1.xpose.msra.mxu0 0.0
        %1008 = vmatprep.subr.mxu0 0.0
        %1009 = vmatpush1.xpose.msra.mxu0 0.0
        %1010 = vmatprep.subr.mxu0 0.0
        %1011 = vmatpush1.xpose.msra.mxu0 0.0
        %1012 = vmatprep.subr.mxu0 0.0
        %1013 = vmatpush1.xpose.msra.mxu0 0.0
        %1014 = vmatprep.subr.mxu0 0.0
        %1015 = vmatpush1.xpose.msra.mxu0 0.0
        %1016 = vmatprep.subr.mxu0 0.0
        %1017 = vmatpush1.xpose.msra.mxu0 0.0
        %1018 = vmatprep.subr.mxu0 0.0
        %1019 = vmatpush1.xpose.msra.mxu0 0.0
        %1020 = vmatprep.subr.mxu0 0.0
        %1021 = vmatpush1.xpose.msra.mxu0 0.0
        %1022 = vmatprep.subr.mxu0 0.0
        %1023 = vmatpush1.xpose.msra.mxu0 0.0
        %1024 = vmatprep.mubr.f32.mxu0 0.0
        %1025 = vmatmul.mubr.f32.gmra.mrb[0].mxu0 %v955
        %v1026 = vpop.f32.mrb[0].mxu0
        %v1027 = vadd.f32 0.0, %v1026
        %v1028 = vpop.f32.mrb[0].mxu0
        %1029 = vdwg.mxu0
        %v1031 = vsel %vm500, %v595, 0
        %v1034 = vsel %vm500, %v697, 0
        %1036 = vmatprep.subr.mxu0 0.0
        %1037 = vmatpush1.xpose.msra.mxu0 %v1034
        %1038 = vmatprep.subr.mxu0 0.0
        %1039 = vmatpush1.xpose.msra.mxu0 0.0
        %1040 = vmatprep.subr.mxu0 0.0
        %1041 = vmatpush1.xpose.msra.mxu0 0.0
        %1042 = vmatprep.subr.mxu0 0.0
        %1043 = vmatpush1.xpose.msra.mxu0 0.0
        %1044 = vmatprep.subr.mxu0 0.0
        %1045 = vmatpush1.xpose.msra.mxu0 0.0
        %1046 = vmatprep.subr.mxu0 0.0
        %1047 = vmatpush1.xpose.msra.mxu0 0.0
        %1048 = vmatprep.subr.mxu0 0.0
        %1049 = vmatpush1.xpose.msra.mxu0 0.0
        %1050 = vmatprep.subr.mxu0 0.0
        %1051 = vmatpush1.xpose.msra.mxu0 0.0
        %1052 = vmatprep.subr.mxu0 0.0
        %1053 = vmatpush1.xpose.msra.mxu0 0.0
        %1054 = vmatprep.subr.mxu0 0.0
        %1055 = vmatpush1.xpose.msra.mxu0 0.0
        %1056 = vmatprep.subr.mxu0 0.0
        %1057 = vmatpush1.xpose.msra.mxu0 0.0
        %1058 = vmatprep.subr.mxu0 0.0
        %1059 = vmatpush1.xpose.msra.mxu0 0.0
        %1060 = vmatprep.subr.mxu0 0.0
        %1061 = vmatpush1.xpose.msra.mxu0 0.0
        %1062 = vmatprep.subr.mxu0 0.0
        %1063 = vmatpush1.xpose.msra.mxu0 0.0
        %1064 = vmatprep.subr.mxu0 0.0
        %1065 = vmatpush1.xpose.msra.mxu0 0.0
        %1066 = vmatprep.subr.mxu0 0.0
        %1067 = vmatpush1.xpose.msra.mxu0 0.0
        %1068 = vmatprep.subr.mxu0 0.0
        %1069 = vmatpush1.xpose.msra.mxu0 0.0
        %1070 = vmatprep.subr.mxu0 0.0
        %1071 = vmatpush1.xpose.msra.mxu0 0.0
        %1072 = vmatprep.subr.mxu0 0.0
        %1073 = vmatpush1.xpose.msra.mxu0 0.0
        %1074 = vmatprep.subr.mxu0 0.0
        %1075 = vmatpush1.xpose.msra.mxu0 0.0
        %1076 = vmatprep.subr.mxu0 0.0
        %1077 = vmatpush1.xpose.msra.mxu0 0.0
        %1078 = vmatprep.subr.mxu0 0.0
        %1079 = vmatpush1.xpose.msra.mxu0 0.0
        %1080 = vmatprep.subr.mxu0 0.0
        %1081 = vmatpush1.xpose.msra.mxu0 0.0
        %1082 = vmatprep.subr.mxu0 0.0
        %1083 = vmatpush1.xpose.msra.mxu0 0.0
        %1084 = vmatprep.subr.mxu0 0.0
        %1085 = vmatpush1.xpose.msra.mxu0 0.0
        %1086 = vmatprep.subr.mxu0 0.0
        %1087 = vmatpush1.xpose.msra.mxu0 0.0
        %1088 = vmatprep.subr.mxu0 0.0
        %1089 = vmatpush1.xpose.msra.mxu0 0.0
        %1090 = vmatprep.subr.mxu0 0.0
        %1091 = vmatpush1.xpose.msra.mxu0 0.0
        %1092 = vmatprep.subr.mxu0 0.0
        %1093 = vmatpush1.xpose.msra.mxu0 0.0
        %1094 = vmatprep.subr.mxu0 0.0
        %1095 = vmatpush1.xpose.msra.mxu0 0.0
        %1096 = vmatprep.subr.mxu0 0.0
        %1097 = vmatpush1.xpose.msra.mxu0 0.0
        %1098 = vmatprep.subr.mxu0 0.0
        %1099 = vmatpush1.xpose.msra.mxu0 0.0
        %1100 = vmatprep.mubr.f32.mxu0 0.0
        %1101 = vmatmul.mubr.f32.gmra.mrb[0].mxu0 %v1031
        %v1102 = vpop.f32.mrb[0].mxu0
        %v1103 = vadd.f32 0.0, %v1102
        %v1104 = vpop.f32.mrb[0].mxu0
        %1105 = vdwg.mxu0
        %v1106 = vld [vmem:[%s434] sm:$0x3]
        %v1107 = vunpack.c.0.s8 %v1106
        %vm1108 = vcmp.eq.s32.totalorder %v1107, 0
        %v1109 = vsel %vm1108, 1, 0
        %vm1110 = vcmp.eq.s32.totalorder %v1109, 1
        %v1111 = vsel %vm1110, -1e+25, %v875
        %v1112 = vsel %vm1110, -1e+25, %v951
        %v1113 = vsel %vm1110, -1e+25, %v1027
        %v1114 = vsel %vm1110, -1e+25, %v1103
        %v1115 = vsel %vm500, %v1111, -inf
        %1116 = vmax.xlane.f32.xlu0 %v1115
        %v1117 = vpop.xlane.xlu0 %1116
        %v1118 = vsel %vm500, %v1112, -inf
        %1119 = vmax.xlane.f32.xlu0 %v1118
        %v1120 = vpop.xlane.xlu0 %1119
        %v1121 = vsel %vm500, %v1113, -inf
        %1122 = vmax.xlane.f32.xlu0 %v1121
        %v1123 = vpop.xlane.xlu0 %1122
        %v1124 = vsel %vm500, %v1114, -inf
        %1125 = vmax.xlane.f32.xlu0 %v1124
        %v1126 = vpop.xlane.xlu0 %1125
        %v1127 = vsub.f32 %v1111, %v1117
        %v1128 = vsub.f32 %v1112, %v1120
        %v1129 = vsub.f32 %v1113, %v1123
        %v1130 = vsub.f32 %v1114, %v1126
        %v1131 = vmul.f32 %v1127, 1.442695
        %v1132 = vpow.pop %v1131
        %v1133 = vmul.f32 %v1128, 1.442695
        %v1134 = vpow.pop %v1133
        %v1135 = vmul.f32 %v1129, 1.442695
        %v1136 = vpow.pop %v1135
        %v1137 = vmul.f32 %v1130, 1.442695
        %v1138 = vpow.pop %v1137
        %v1139 = vsel %vm500, %v1132, 0.0
        %1140 = vadd.xlane.f32.xlu0 %v1139
        %v1141 = vpop.xlane.xlu0 %1140
        %v1142 = vsel %vm500, %v1134, 0.0
        %1143 = vadd.xlane.f32.xlu0 %v1142
        %v1144 = vpop.xlane.xlu0 %1143
        %v1145 = vsel %vm500, %v1136, 0.0
        %1146 = vadd.xlane.f32.xlu0 %v1145
        %v1147 = vpop.xlane.xlu0 %1146
        %v1148 = vsel %vm500, %v1138, 0.0
        %1149 = vadd.xlane.f32.xlu0 %v1148
        %v1150 = vpop.xlane.xlu0 %1149
        %v1151 = vrcp.pop %v1141
        %v1152 = vrcp.pop %v1144
        %v1153 = vrcp.pop %v1147
        %v1154 = vrcp.pop %v1150
        %v1155 = vmul.f32 %v1132, %v1151
        %v1156 = vmul.f32 %v1134, %v1152
        %v1157 = vmul.f32 %v1136, %v1153
        %v1158 = vmul.f32 %v1138, %v1154
        %v1160 = vsel %vm500, %v1155, 0
        %1162 = vmatprep.subr.mxu0 0.0
        %1163 = vmatpush1.msra.mxu0 %v784
        %1164 = vmatprep.subr.mxu0 0.0
        %1165 = vmatpush1.msra.mxu0 0.0
        %1166 = vmatprep.subr.mxu0 0.0
        %1167 = vmatpush1.msra.mxu0 0.0
        %1168 = vmatprep.subr.mxu0 0.0
        %1169 = vmatpush1.msra.mxu0 0.0
        %1170 = vmatprep.subr.mxu0 0.0
        %1171 = vmatpush1.msra.mxu0 0.0
        %1172 = vmatprep.subr.mxu0 0.0
        %1173 = vmatpush1.msra.mxu0 0.0
        %1174 = vmatprep.subr.mxu0 0.0
        %1175 = vmatpush1.msra.mxu0 0.0
        %1176 = vmatprep.subr.mxu0 0.0
        %1177 = vmatpush1.msra.mxu0 0.0
        %1178 = vmatprep.subr.mxu0 0.0
        %1179 = vmatpush1.msra.mxu0 0.0
        %1180 = vmatprep.subr.mxu0 0.0
        %1181 = vmatpush1.msra.mxu0 0.0
        %1182 = vmatprep.subr.mxu0 0.0
        %1183 = vmatpush1.msra.mxu0 0.0
        %1184 = vmatprep.subr.mxu0 0.0
        %1185 = vmatpush1.msra.mxu0 0.0
        %1186 = vmatprep.subr.mxu0 0.0
        %1187 = vmatpush1.msra.mxu0 0.0
        %1188 = vmatprep.subr.mxu0 0.0
        %1189 = vmatpush1.msra.mxu0 0.0
        %1190 = vmatprep.subr.mxu0 0.0
        %1191 = vmatpush1.msra.mxu0 0.0
        %1192 = vmatprep.subr.mxu0 0.0
        %1193 = vmatpush1.msra.mxu0 0.0
        %1194 = vmatprep.subr.mxu0 0.0
        %1195 = vmatpush1.msra.mxu0 0.0
        %1196 = vmatprep.subr.mxu0 0.0
        %1197 = vmatpush1.msra.mxu0 0.0
        %1198 = vmatprep.subr.mxu0 0.0
        %1199 = vmatpush1.msra.mxu0 0.0
        %1200 = vmatprep.subr.mxu0 0.0
        %1201 = vmatpush1.msra.mxu0 0.0
        %1202 = vmatprep.subr.mxu0 0.0
        %1203 = vmatpush1.msra.mxu0 0.0
        %1204 = vmatprep.subr.mxu0 0.0
        %1205 = vmatpush1.msra.mxu0 0.0
        %1206 = vmatprep.subr.mxu0 0.0
        %1207 = vmatpush1.msra.mxu0 0.0
        %1208 = vmatprep.subr.mxu0 0.0
        %1209 = vmatpush1.msra.mxu0 0.0
        %1210 = vmatprep.subr.mxu0 0.0
        %1211 = vmatpush1.msra.mxu0 0.0
        %1212 = vmatprep.subr.mxu0 0.0
        %1213 = vmatpush1.msra.mxu0 0.0
        %1214 = vmatprep.subr.mxu0 0.0
        %1215 = vmatpush1.msra.mxu0 0.0
        %1216 = vmatprep.subr.mxu0 0.0
        %1217 = vmatpush1.msra.mxu0 0.0
        %1218 = vmatprep.subr.mxu0 0.0
        %1219 = vmatpush1.msra.mxu0 0.0
        %1220 = vmatprep.subr.mxu0 0.0
        %1221 = vmatpush1.msra.mxu0 0.0
        %1222 = vmatprep.subr.mxu0 0.0
        %1223 = vmatpush1.msra.mxu0 0.0
        %1224 = vmatprep.subr.mxu0 0.0
        %1225 = vmatpush1.msra.mxu0 0.0
        %1226 = vmatprep.mubr.f32.mxu0 0.0
        %1227 = vmatmul.mubr.f32.gmra.mrb[0].mxu0 %v1160
        %v1228 = vpop.f32.mrb[0].mxu0
        %v1229 = vadd.f32 0.0, %v1228
        %v1230 = vpop.f32.mrb[0].mxu0
        %1231 = vdwg.mxu0
        %v1233 = vsel %vm500, %v1156, 0
        %1235 = vmatprep.subr.mxu0 0.0
        %1236 = vmatpush1.msra.mxu0 %v789
        %1237 = vmatprep.subr.mxu0 0.0
        %1238 = vmatpush1.msra.mxu0 0.0
        %1239 = vmatprep.subr.mxu0 0.0
        %1240 = vmatpush1.msra.mxu0 0.0
        %1241 = vmatprep.subr.mxu0 0.0
        %1242 = vmatpush1.msra.mxu0 0.0
        %1243 = vmatprep.subr.mxu0 0.0
        %1244 = vmatpush1.msra.mxu0 0.0
        %1245 = vmatprep.subr.mxu0 0.0
        %1246 = vmatpush1.msra.mxu0 0.0
        %1247 = vmatprep.subr.mxu0 0.0
        %1248 = vmatpush1.msra.mxu0 0.0
        %1249 = vmatprep.subr.mxu0 0.0
        %1250 = vmatpush1.msra.mxu0 0.0
        %1251 = vmatprep.subr.mxu0 0.0
        %1252 = vmatpush1.msra.mxu0 0.0
        %1253 = vmatprep.subr.mxu0 0.0
        %1254 = vmatpush1.msra.mxu0 0.0
        %1255 = vmatprep.subr.mxu0 0.0
        %1256 = vmatpush1.msra.mxu0 0.0
        %1257 = vmatprep.subr.mxu0 0.0
        %1258 = vmatpush1.msra.mxu0 0.0
        %1259 = vmatprep.subr.mxu0 0.0
        %1260 = vmatpush1.msra.mxu0 0.0
        %1261 = vmatprep.subr.mxu0 0.0
        %1262 = vmatpush1.msra.mxu0 0.0
        %1263 = vmatprep.subr.mxu0 0.0
        %1264 = vmatpush1.msra.mxu0 0.0
        %1265 = vmatprep.subr.mxu0 0.0
        %1266 = vmatpush1.msra.mxu0 0.0
        %1267 = vmatprep.subr.mxu0 0.0
        %1268 = vmatpush1.msra.mxu0 0.0
        %1269 = vmatprep.subr.mxu0 0.0
        %1270 = vmatpush1.msra.mxu0 0.0
        %1271 = vmatprep.subr.mxu0 0.0
        %1272 = vmatpush1.msra.mxu0 0.0
        %1273 = vmatprep.subr.mxu0 0.0
        %1274 = vmatpush1.msra.mxu0 0.0
        %1275 = vmatprep.subr.mxu0 0.0
        %1276 = vmatpush1.msra.mxu0 0.0
        %1277 = vmatprep.subr.mxu0 0.0
        %1278 = vmatpush1.msra.mxu0 0.0
        %1279 = vmatprep.subr.mxu0 0.0
        %1280 = vmatpush1.msra.mxu0 0.0
        %1281 = vmatprep.subr.mxu0 0.0
        %1282 = vmatpush1.msra.mxu0 0.0
        %1283 = vmatprep.subr.mxu0 0.0
        %1284 = vmatpush1.msra.mxu0 0.0
        %1285 = vmatprep.subr.mxu0 0.0
        %1286 = vmatpush1.msra.mxu0 0.0
        %1287 = vmatprep.subr.mxu0 0.0
        %1288 = vmatpush1.msra.mxu0 0.0
        %1289 = vmatprep.subr.mxu0 0.0
        %1290 = vmatpush1.msra.mxu0 0.0
        %1291 = vmatprep.subr.mxu0 0.0
        %1292 = vmatpush1.msra.mxu0 0.0
        %1293 = vmatprep.subr.mxu0 0.0
        %1294 = vmatpush1.msra.mxu0 0.0
        %1295 = vmatprep.subr.mxu0 0.0
        %1296 = vmatpush1.msra.mxu0 0.0
        %1297 = vmatprep.subr.mxu0 0.0
        %1298 = vmatpush1.msra.mxu0 0.0
        %1299 = vmatprep.mubr.f32.mxu0 0.0
        %1300 = vmatmul.mubr.f32.gmra.mrb[0].mxu0 %v1233
        %v1301 = vpop.f32.mrb[0].mxu0
        %v1302 = vadd.f32 0.0, %v1301
        %v1303 = vpop.f32.mrb[0].mxu0
        %1304 = vdwg.mxu0
        %v1306 = vsel %vm500, %v1157, 0
        %1308 = vmatprep.subr.mxu0 0.0
        %1309 = vmatpush1.msra.mxu0 %v794
        %1310 = vmatprep.subr.mxu0 0.0
        %1311 = vmatpush1.msra.mxu0 0.0
        %1312 = vmatprep.subr.mxu0 0.0
        %1313 = vmatpush1.msra.mxu0 0.0
        %1314 = vmatprep.subr.mxu0 0.0
        %1315 = vmatpush1.msra.mxu0 0.0
        %1316 = vmatprep.subr.mxu0 0.0
        %1317 = vmatpush1.msra.mxu0 0.0
        %1318 = vmatprep.subr.mxu0 0.0
        %1319 = vmatpush1.msra.mxu0 0.0
        %1320 = vmatprep.subr.mxu0 0.0
        %1321 = vmatpush1.msra.mxu0 0.0
        %1322 = vmatprep.subr.mxu0 0.0
        %1323 = vmatpush1.msra.mxu0 0.0
        %1324 = vmatprep.subr.mxu0 0.0
        %1325 = vmatpush1.msra.mxu0 0.0
        %1326 = vmatprep.subr.mxu0 0.0
        %1327 = vmatpush1.msra.mxu0 0.0
        %1328 = vmatprep.subr.mxu0 0.0
        %1329 = vmatpush1.msra.mxu0 0.0
        %1330 = vmatprep.subr.mxu0 0.0
        %1331 = vmatpush1.msra.mxu0 0.0
        %1332 = vmatprep.subr.mxu0 0.0
        %1333 = vmatpush1.msra.mxu0 0.0
        %1334 = vmatprep.subr.mxu0 0.0
        %1335 = vmatpush1.msra.mxu0 0.0
        %1336 = vmatprep.subr.mxu0 0.0
        %1337 = vmatpush1.msra.mxu0 0.0
        %1338 = vmatprep.subr.mxu0 0.0
        %1339 = vmatpush1.msra.mxu0 0.0
        %1340 = vmatprep.subr.mxu0 0.0
        %1341 = vmatpush1.msra.mxu0 0.0
        %1342 = vmatprep.subr.mxu0 0.0
        %1343 = vmatpush1.msra.mxu0 0.0
        %1344 = vmatprep.subr.mxu0 0.0
        %1345 = vmatpush1.msra.mxu0 0.0
        %1346 = vmatprep.subr.mxu0 0.0
        %1347 = vmatpush1.msra.mxu0 0.0
        %1348 = vmatprep.subr.mxu0 0.0
        %1349 = vmatpush1.msra.mxu0 0.0
        %1350 = vmatprep.subr.mxu0 0.0
        %1351 = vmatpush1.msra.mxu0 0.0
        %1352 = vmatprep.subr.mxu0 0.0
        %1353 = vmatpush1.msra.mxu0 0.0
        %1354 = vmatprep.subr.mxu0 0.0
        %1355 = vmatpush1.msra.mxu0 0.0
        %1356 = vmatprep.subr.mxu0 0.0
        %1357 = vmatpush1.msra.mxu0 0.0
        %1358 = vmatprep.subr.mxu0 0.0
        %1359 = vmatpush1.msra.mxu0 0.0
        %1360 = vmatprep.subr.mxu0 0.0
        %1361 = vmatpush1.msra.mxu0 0.0
        %1362 = vmatprep.subr.mxu0 0.0
        %1363 = vmatpush1.msra.mxu0 0.0
        %1364 = vmatprep.subr.mxu0 0.0
        %1365 = vmatpush1.msra.mxu0 0.0
        %1366 = vmatprep.subr.mxu0 0.0
        %1367 = vmatpush1.msra.mxu0 0.0
        %1368 = vmatprep.subr.mxu0 0.0
        %1369 = vmatpush1.msra.mxu0 0.0
        %1370 = vmatprep.subr.mxu0 0.0
        %1371 = vmatpush1.msra.mxu0 0.0
        %1372 = vmatprep.mubr.f32.mxu0 0.0
        %1373 = vmatmul.mubr.f32.gmra.mrb[0].mxu0 %v1306
        %v1374 = vpop.f32.mrb[0].mxu0
        %v1375 = vadd.f32 0.0, %v1374
        %v1376 = vpop.f32.mrb[0].mxu0
        %1377 = vdwg.mxu0
        %v1379 = vsel %vm500, %v1158, 0
        %1381 = vmatprep.subr.mxu0 0.0
        %1382 = vmatpush1.msra.mxu0 %v799
        %1383 = vmatprep.subr.mxu0 0.0
        %1384 = vmatpush1.msra.mxu0 0.0
        %1385 = vmatprep.subr.mxu0 0.0
        %1386 = vmatpush1.msra.mxu0 0.0
        %1387 = vmatprep.subr.mxu0 0.0
        %1388 = vmatpush1.msra.mxu0 0.0
        %1389 = vmatprep.subr.mxu0 0.0
        %1390 = vmatpush1.msra.mxu0 0.0
        %1391 = vmatprep.subr.mxu0 0.0
        %1392 = vmatpush1.msra.mxu0 0.0
        %1393 = vmatprep.subr.mxu0 0.0
        %1394 = vmatpush1.msra.mxu0 0.0
        %1395 = vmatprep.subr.mxu0 0.0
        %1396 = vmatpush1.msra.mxu0 0.0
        %1397 = vmatprep.subr.mxu0 0.0
        %1398 = vmatpush1.msra.mxu0 0.0
        %1399 = vmatprep.subr.mxu0 0.0
        %1400 = vmatpush1.msra.mxu0 0.0
        %1401 = vmatprep.subr.mxu0 0.0
        %1402 = vmatpush1.msra.mxu0 0.0
        %1403 = vmatprep.subr.mxu0 0.0
        %1404 = vmatpush1.msra.mxu0 0.0
        %1405 = vmatprep.subr.mxu0 0.0
        %1406 = vmatpush1.msra.mxu0 0.0
        %1407 = vmatprep.subr.mxu0 0.0
        %1408 = vmatpush1.msra.mxu0 0.0
        %1409 = vmatprep.subr.mxu0 0.0
        %1410 = vmatpush1.msra.mxu0 0.0
        %1411 = vmatprep.subr.mxu0 0.0
        %1412 = vmatpush1.msra.mxu0 0.0
        %1413 = vmatprep.subr.mxu0 0.0
        %1414 = vmatpush1.msra.mxu0 0.0
        %1415 = vmatprep.subr.mxu0 0.0
        %1416 = vmatpush1.msra.mxu0 0.0
        %1417 = vmatprep.subr.mxu0 0.0
        %1418 = vmatpush1.msra.mxu0 0.0
        %1419 = vmatprep.subr.mxu0 0.0
        %1420 = vmatpush1.msra.mxu0 0.0
        %1421 = vmatprep.subr.mxu0 0.0
        %1422 = vmatpush1.msra.mxu0 0.0
        %1423 = vmatprep.subr.mxu0 0.0
        %1424 = vmatpush1.msra.mxu0 0.0
        %1425 = vmatprep.subr.mxu0 0.0
        %1426 = vmatpush1.msra.mxu0 0.0
        %1427 = vmatprep.subr.mxu0 0.0
        %1428 = vmatpush1.msra.mxu0 0.0
        %1429 = vmatprep.subr.mxu0 0.0
        %1430 = vmatpush1.msra.mxu0 0.0
        %1431 = vmatprep.subr.mxu0 0.0
        %1432 = vmatpush1.msra.mxu0 0.0
        %1433 = vmatprep.subr.mxu0 0.0
        %1434 = vmatpush1.msra.mxu0 0.0
        %1435 = vmatprep.subr.mxu0 0.0
        %1436 = vmatpush1.msra.mxu0 0.0
        %1437 = vmatprep.subr.mxu0 0.0
        %1438 = vmatpush1.msra.mxu0 0.0
        %1439 = vmatprep.subr.mxu0 0.0
        %1440 = vmatpush1.msra.mxu0 0.0
        %1441 = vmatprep.subr.mxu0 0.0
        %1442 = vmatpush1.msra.mxu0 0.0
        %1443 = vmatprep.subr.mxu0 0.0
        %1444 = vmatpush1.msra.mxu0 0.0
        %1445 = vmatprep.mubr.f32.mxu0 0.0
        %1446 = vmatmul.mubr.f32.gmra.mrb[0].mxu0 %v1379
        %v1447 = vpop.f32.mrb[0].mxu0
        %v1448 = vadd.f32 0.0, %v1447
        %v1449 = vpop.f32.mrb[0].mxu0
        %1450 = vdwg.mxu0
        %v1451 = vld [vmem:[#allocation11] sm:$0xff]
        %v1452 = vld [vmem:[#allocation11 + $0x8] sm:$0xff]
        %v1454 = vsel %vm500, %v1302, 0
        %1456 = vmatprep.subr.mxu0 0.0
        %1457 = vmatpush1.msra.mxu0 %v1452
        %1458 = vmatprep.subr.mxu0 0.0
        %1459 = vmatpush1.msra.mxu0 0.0
        %1460 = vmatprep.subr.mxu0 0.0
        %1461 = vmatpush1.msra.mxu0 0.0
        %1462 = vmatprep.subr.mxu0 0.0
        %1463 = vmatpush1.msra.mxu0 0.0
        %1464 = vmatprep.subr.mxu0 0.0
        %1465 = vmatpush1.msra.mxu0 0.0
        %1466 = vmatprep.subr.mxu0 0.0
        %1467 = vmatpush1.msra.mxu0 0.0
        %1468 = vmatprep.subr.mxu0 0.0
        %1469 = vmatpush1.msra.mxu0 0.0
        %1470 = vmatprep.subr.mxu0 0.0
        %1471 = vmatpush1.msra.mxu0 0.0
        %1472 = vmatprep.subr.mxu0 0.0
        %1473 = vmatpush1.msra.mxu0 0.0
        %1474 = vmatprep.subr.mxu0 0.0
        %1475 = vmatpush1.msra.mxu0 0.0
        %1476 = vmatprep.subr.mxu0 0.0
        %1477 = vmatpush1.msra.mxu0 0.0
        %1478 = vmatprep.subr.mxu0 0.0
        %1479 = vmatpush1.msra.mxu0 0.0
        %1480 = vmatprep.subr.mxu0 0.0
        %1481 = vmatpush1.msra.mxu0 0.0
        %1482 = vmatprep.subr.mxu0 0.0
        %1483 = vmatpush1.msra.mxu0 0.0
        %1484 = vmatprep.subr.mxu0 0.0
        %1485 = vmatpush1.msra.mxu0 0.0
        %1486 = vmatprep.subr.mxu0 0.0
        %1487 = vmatpush1.msra.mxu0 0.0
        %1488 = vmatprep.subr.mxu0 0.0
        %1489 = vmatpush1.msra.mxu0 0.0
        %1490 = vmatprep.subr.mxu0 0.0
        %1491 = vmatpush1.msra.mxu0 0.0
        %1492 = vmatprep.subr.mxu0 0.0
        %1493 = vmatpush1.msra.mxu0 0.0
        %1494 = vmatprep.subr.mxu0 0.0
        %1495 = vmatpush1.msra.mxu0 0.0
        %1496 = vmatprep.subr.mxu0 0.0
        %1497 = vmatpush1.msra.mxu0 0.0
        %1498 = vmatprep.subr.mxu0 0.0
        %1499 = vmatpush1.msra.mxu0 0.0
        %1500 = vmatprep.subr.mxu0 0.0
        %1501 = vmatpush1.msra.mxu0 0.0
        %1502 = vmatprep.subr.mxu0 0.0
        %1503 = vmatpush1.msra.mxu0 0.0
        %1504 = vmatprep.subr.mxu0 0.0
        %1505 = vmatpush1.msra.mxu0 0.0
        %1506 = vmatprep.subr.mxu0 0.0
        %1507 = vmatpush1.msra.mxu0 0.0
        %1508 = vmatprep.subr.mxu0 0.0
        %1509 = vmatpush1.msra.mxu0 0.0
        %1510 = vmatprep.subr.mxu0 0.0
        %1511 = vmatpush1.msra.mxu0 0.0
        %1512 = vmatprep.subr.mxu0 0.0
        %1513 = vmatpush1.msra.mxu0 0.0
        %1514 = vmatprep.subr.mxu0 0.0
        %1515 = vmatpush1.msra.mxu0 0.0
        %1516 = vmatprep.subr.mxu0 0.0
        %1517 = vmatpush1.msra.mxu0 0.0
        %1518 = vmatprep.subr.mxu0 0.0
        %1519 = vmatpush1.msra.mxu0 0.0
        %1520 = vmatprep.mubr.f32.mxu0 0.0
        %1521 = vmatmul.mubr.f32.gmra.mrb[0].mxu0 %v1454
        %v1522 = vpop.f32.mrb[0].mxu0
        %v1523 = vadd.f32 0.0, %v1522
        %v1524 = vpop.f32.mrb[0].mxu0
        %1525 = vdwg.mxu0
        %v1527 = vsel %vm500, %v1229, 0
        %1529 = vmatprep.subr.mxu0 0.0
        %1530 = vmatpush1.msra.mxu0 %v1451
        %1531 = vmatprep.subr.mxu0 0.0
        %1532 = vmatpush1.msra.mxu0 0.0
        %1533 = vmatprep.subr.mxu0 0.0
        %1534 = vmatpush1.msra.mxu0 0.0
        %1535 = vmatprep.subr.mxu0 0.0
        %1536 = vmatpush1.msra.mxu0 0.0
        %1537 = vmatprep.subr.mxu0 0.0
        %1538 = vmatpush1.msra.mxu0 0.0
        %1539 = vmatprep.subr.mxu0 0.0
        %1540 = vmatpush1.msra.mxu0 0.0
        %1541 = vmatprep.subr.mxu0 0.0
        %1542 = vmatpush1.msra.mxu0 0.0
        %1543 = vmatprep.subr.mxu0 0.0
        %1544 = vmatpush1.msra.mxu0 0.0
        %1545 = vmatprep.subr.mxu0 0.0
        %1546 = vmatpush1.msra.mxu0 0.0
        %1547 = vmatprep.subr.mxu0 0.0
        %1548 = vmatpush1.msra.mxu0 0.0
        %1549 = vmatprep.subr.mxu0 0.0
        %1550 = vmatpush1.msra.mxu0 0.0
        %1551 = vmatprep.subr.mxu0 0.0
        %1552 = vmatpush1.msra.mxu0 0.0
        %1553 = vmatprep.subr.mxu0 0.0
        %1554 = vmatpush1.msra.mxu0 0.0
        %1555 = vmatprep.subr.mxu0 0.0
        %1556 = vmatpush1.msra.mxu0 0.0
        %1557 = vmatprep.subr.mxu0 0.0
        %1558 = vmatpush1.msra.mxu0 0.0
        %1559 = vmatprep.subr.mxu0 0.0
        %1560 = vmatpush1.msra.mxu0 0.0
        %1561 = vmatprep.subr.mxu0 0.0
        %1562 = vmatpush1.msra.mxu0 0.0
        %1563 = vmatprep.subr.mxu0 0.0
        %1564 = vmatpush1.msra.mxu0 0.0
        %1565 = vmatprep.subr.mxu0 0.0
        %1566 = vmatpush1.msra.mxu0 0.0
        %1567 = vmatprep.subr.mxu0 0.0
        %1568 = vmatpush1.msra.mxu0 0.0
        %1569 = vmatprep.subr.mxu0 0.0
        %1570 = vmatpush1.msra.mxu0 0.0
        %1571 = vmatprep.subr.mxu0 0.0
        %1572 = vmatpush1.msra.mxu0 0.0
        %1573 = vmatprep.subr.mxu0 0.0
        %1574 = vmatpush1.msra.mxu0 0.0
        %1575 = vmatprep.subr.mxu0 0.0
        %1576 = vmatpush1.msra.mxu0 0.0
        %1577 = vmatprep.subr.mxu0 0.0
        %1578 = vmatpush1.msra.mxu0 0.0
        %1579 = vmatprep.subr.mxu0 0.0
        %1580 = vmatpush1.msra.mxu0 0.0
        %1581 = vmatprep.subr.mxu0 0.0
        %1582 = vmatpush1.msra.mxu0 0.0
        %1583 = vmatprep.subr.mxu0 0.0
        %1584 = vmatpush1.msra.mxu0 0.0
        %1585 = vmatprep.subr.mxu0 0.0
        %1586 = vmatpush1.msra.mxu0 0.0
        %1587 = vmatprep.subr.mxu0 0.0
        %1588 = vmatpush1.msra.mxu0 0.0
        %1589 = vmatprep.subr.mxu0 0.0
        %1590 = vmatpush1.msra.mxu0 0.0
        %1591 = vmatprep.subr.mxu0 0.0
        %1592 = vmatpush1.msra.mxu0 0.0
        %1593 = vmatprep.mubr.f32.mxu0 0.0
        %1594 = vmatmul.mubr.f32.gmra.mrb[0].mxu0 %v1527
        %v1595 = vpop.f32.mrb[0].mxu0
        %v1596 = vadd.f32 %v1523, %v1595
        %v1597 = vpop.f32.mrb[0].mxu0
        %1598 = vdwg.mxu0
        %v1599 = vld [vmem:[#allocation11 + $0x10] sm:$0xff]
        %v1601 = vsel %vm500, %v1375, 0
        %1603 = vmatprep.subr.mxu0 0.0
        %1604 = vmatpush1.msra.mxu0 %v1599
        %1605 = vmatprep.subr.mxu0 0.0
        %1606 = vmatpush1.msra.mxu0 0.0
        %1607 = vmatprep.subr.mxu0 0.0
        %1608 = vmatpush1.msra.mxu0 0.0
        %1609 = vmatprep.subr.mxu0 0.0
        %1610 = vmatpush1.msra.mxu0 0.0
        %1611 = vmatprep.subr.mxu0 0.0
        %1612 = vmatpush1.msra.mxu0 0.0
        %1613 = vmatprep.subr.mxu0 0.0
        %1614 = vmatpush1.msra.mxu0 0.0
        %1615 = vmatprep.subr.mxu0 0.0
        %1616 = vmatpush1.msra.mxu0 0.0
        %1617 = vmatprep.subr.mxu0 0.0
        %1618 = vmatpush1.msra.mxu0 0.0
        %1619 = vmatprep.subr.mxu0 0.0
        %1620 = vmatpush1.msra.mxu0 0.0
        %1621 = vmatprep.subr.mxu0 0.0
        %1622 = vmatpush1.msra.mxu0 0.0
        %1623 = vmatprep.subr.mxu0 0.0
        %1624 = vmatpush1.msra.mxu0 0.0
        %1625 = vmatprep.subr.mxu0 0.0
        %1626 = vmatpush1.msra.mxu0 0.0
        %1627 = vmatprep.subr.mxu0 0.0
        %1628 = vmatpush1.msra.mxu0 0.0
        %1629 = vmatprep.subr.mxu0 0.0
        %1630 = vmatpush1.msra.mxu0 0.0
        %1631 = vmatprep.subr.mxu0 0.0
        %1632 = vmatpush1.msra.mxu0 0.0
        %1633 = vmatprep.subr.mxu0 0.0
        %1634 = vmatpush1.msra.mxu0 0.0
        %1635 = vmatprep.subr.mxu0 0.0
        %1636 = vmatpush1.msra.mxu0 0.0
        %1637 = vmatprep.subr.mxu0 0.0
        %1638 = vmatpush1.msra.mxu0 0.0
        %1639 = vmatprep.subr.mxu0 0.0
        %1640 = vmatpush1.msra.mxu0 0.0
        %1641 = vmatprep.subr.mxu0 0.0
        %1642 = vmatpush1.msra.mxu0 0.0
        %1643 = vmatprep.subr.mxu0 0.0
        %1644 = vmatpush1.msra.mxu0 0.0
        %1645 = vmatprep.subr.mxu0 0.0
        %1646 = vmatpush1.msra.mxu0 0.0
        %1647 = vmatprep.subr.mxu0 0.0
        %1648 = vmatpush1.msra.mxu0 0.0
        %1649 = vmatprep.subr.mxu0 0.0
        %1650 = vmatpush1.msra.mxu0 0.0
        %1651 = vmatprep.subr.mxu0 0.0
        %1652 = vmatpush1.msra.mxu0 0.0
        %1653 = vmatprep.subr.mxu0 0.0
        %1654 = vmatpush1.msra.mxu0 0.0
        %1655 = vmatprep.subr.mxu0 0.0
        %1656 = vmatpush1.msra.mxu0 0.0
        %1657 = vmatprep.subr.mxu0 0.0
        %1658 = vmatpush1.msra.mxu0 0.0
        %1659 = vmatprep.subr.mxu0 0.0
        %1660 = vmatpush1.msra.mxu0 0.0
        %1661 = vmatprep.subr.mxu0 0.0
        %1662 = vmatpush1.msra.mxu0 0.0
        %1663 = vmatprep.subr.mxu0 0.0
        %1664 = vmatpush1.msra.mxu0 0.0
        %1665 = vmatprep.subr.mxu0 0.0
        %1666 = vmatpush1.msra.mxu0 0.0
        %1667 = vmatprep.mubr.f32.mxu0 0.0
        %1668 = vmatmul.mubr.f32.gmra.mrb[0].mxu0 %v1601
        %v1669 = vpop.f32.mrb[0].mxu0
        %v1670 = vadd.f32 0.0, %v1669
        %v1671 = vpop.f32.mrb[0].mxu0
        %1672 = vdwg.mxu0
        %v1673 = vadd.f32 %v1596, %v1670
        %v1674 = vld [vmem:[#allocation11 + $0x18] sm:$0xff]
        %v1676 = vsel %vm500, %v1448, 0
        %1678 = vmatprep.subr.mxu0 0.0
        %1679 = vmatpush1.msra.mxu0 %v1674
        %1680 = vmatprep.subr.mxu0 0.0
        %1681 = vmatpush1.msra.mxu0 0.0
        %1682 = vmatprep.subr.mxu0 0.0
        %1683 = vmatpush1.msra.mxu0 0.0
        %1684 = vmatprep.subr.mxu0 0.0
        %1685 = vmatpush1.msra.mxu0 0.0
        %1686 = vmatprep.subr.mxu0 0.0
        %1687 = vmatpush1.msra.mxu0 0.0
        %1688 = vmatprep.subr.mxu0 0.0
        %1689 = vmatpush1.msra.mxu0 0.0
        %1690 = vmatprep.subr.mxu0 0.0
        %1691 = vmatpush1.msra.mxu0 0.0
        %1692 = vmatprep.subr.mxu0 0.0
        %1693 = vmatpush1.msra.mxu0 0.0
        %1694 = vmatprep.subr.mxu0 0.0
        %1695 = vmatpush1.msra.mxu0 0.0
        %1696 = vmatprep.subr.mxu0 0.0
        %1697 = vmatpush1.msra.mxu0 0.0
        %1698 = vmatprep.subr.mxu0 0.0
        %1699 = vmatpush1.msra.mxu0 0.0
        %1700 = vmatprep.subr.mxu0 0.0
        %1701 = vmatpush1.msra.mxu0 0.0
        %1702 = vmatprep.subr.mxu0 0.0
        %1703 = vmatpush1.msra.mxu0 0.0
        %1704 = vmatprep.subr.mxu0 0.0
        %1705 = vmatpush1.msra.mxu0 0.0
        %1706 = vmatprep.subr.mxu0 0.0
        %1707 = vmatpush1.msra.mxu0 0.0
        %1708 = vmatprep.subr.mxu0 0.0
        %1709 = vmatpush1.msra.mxu0 0.0
        %1710 = vmatprep.subr.mxu0 0.0
        %1711 = vmatpush1.msra.mxu0 0.0
        %1712 = vmatprep.subr.mxu0 0.0
        %1713 = vmatpush1.msra.mxu0 0.0
        %1714 = vmatprep.subr.mxu0 0.0
        %1715 = vmatpush1.msra.mxu0 0.0
        %1716 = vmatprep.subr.mxu0 0.0
        %1717 = vmatpush1.msra.mxu0 0.0
        %1718 = vmatprep.subr.mxu0 0.0
        %1719 = vmatpush1.msra.mxu0 0.0
        %1720 = vmatprep.subr.mxu0 0.0
        %1721 = vmatpush1.msra.mxu0 0.0
        %1722 = vmatprep.subr.mxu0 0.0
        %1723 = vmatpush1.msra.mxu0 0.0
        %1724 = vmatprep.subr.mxu0 0.0
        %1725 = vmatpush1.msra.mxu0 0.0
        %1726 = vmatprep.subr.mxu0 0.0
        %1727 = vmatpush1.msra.mxu0 0.0
        %1728 = vmatprep.subr.mxu0 0.0
        %1729 = vmatpush1.msra.mxu0 0.0
        %1730 = vmatprep.subr.mxu0 0.0
        %1731 = vmatpush1.msra.mxu0 0.0
        %1732 = vmatprep.subr.mxu0 0.0
        %1733 = vmatpush1.msra.mxu0 0.0
        %1734 = vmatprep.subr.mxu0 0.0
        %1735 = vmatpush1.msra.mxu0 0.0
        %1736 = vmatprep.subr.mxu0 0.0
        %1737 = vmatpush1.msra.mxu0 0.0
        %1738 = vmatprep.subr.mxu0 0.0
        %1739 = vmatpush1.msra.mxu0 0.0
        %1740 = vmatprep.subr.mxu0 0.0
        %1741 = vmatpush1.msra.mxu0 0.0
        %1742 = vmatprep.mubr.f32.mxu0 0.0
        %1743 = vmatmul.mubr.f32.gmra.mrb[0].mxu0 %v1676
        %v1744 = vpop.f32.mrb[0].mxu0
        %v1745 = vadd.f32 0.0, %v1744
        %v1746 = vpop.f32.mrb[0].mxu0
        %1747 = vdwg.mxu0
        %v1748 = vadd.f32 %v1673, %v1745
        %v1749 = vld [vmem:[%s8] sm:$0x1]
        %v1751 = vlaneseq
        %v1752 = vshrl.u32 %v1751, 7
        %v1753 = vsub.s32 0, %v1752
        %v1754 = vrot.slane %v1749, %v1753
        %v1756 = vadd.f32 %v1748, %v1754
        %vm1757 = vcmask 261120
        %1758 = vst.msk [vmem:[%s491] sm:$0xff] %vm1757, %v1756
        %s1759 = sand.u32 %s250, 1
        %s1760 = scalar_lea.sflag [#allocation4], %s1759
        %s1761 = sand.u32 %s250, 1
        %s1762 = smul.addr %s1761, 8
        %s1763 = scalar_lea.vmem [#allocation13], %s1762
        // Predicated region
        $region81: #{tpu_custom_call.1} parent=55 // pred_check
          %p1764 = pneg %p260
        $region82: #{tpu_custom_call.1} parent=55 // pred_check_branch
          %1766 = sbr.rel (%p1764) target = $region84
        $region83: #{tpu_custom_call.1} parent=55 // pred_region
          %s1768 = ssub.s32 128, 128
          %1769 = vsyncadd %s1760, %s1768
          %s1770 = smul.addr %s33, 128
          %s1771 = scalar_lea.hbm %s9, %s1770
          %s1773 = sshll.u32 %s1763, 4
          %s1774 = int_to_ptr.vmem [resolvable:$true] %s1773
          %1776 = dma.vmem_to_hbm [thread:$0]  %s1774, 128, %s1771, %s1760
        $region84: #{tpu_custom_call.1} parent=55 // pred_fallthru
          _
      $region56: #{tpu_custom_call.1} parent=5 // pred_fallthru
        _
      %p1777 = scmp.le.s32.totalorder 2, %s28
      // Predicated region
      $region85: #{tpu_custom_call.1} parent=5 // pred_check
        %p1778 = pneg %p1777
      $region86: #{tpu_custom_call.1} parent=5 // pred_check_branch
        %1780 = sbr.rel (%p1778) target = $region88
      $region87: #{tpu_custom_call.1} parent=5 // pred_region
        %s1781 = ssub.s32 %s28, 2
        // Predicated region
        $region89: #{tpu_custom_call.1} parent=87 // pred_check
          %p1782 = pneg %p266
        $region90: #{tpu_custom_call.1} parent=87 // pred_check_branch
          %1784 = sbr.rel (%p1782) target = $region92
        $region91: #{tpu_custom_call.1} parent=87 // pred_region
          %s1785 = sand.u32 %s251, 1
          %s1786 = scalar_lea.sflag [#allocation4], %s1785
          %s1787 = sand.u32 %s251, 1
          %s1788 = smul.addr %s1787, 8
          %s1789 = scalar_lea.vmem [#allocation13], %s1788
          %1790 = dma.done %s1786, 128
        $region92: #{tpu_custom_call.1} parent=87 // pred_fallthru
          _
      $region88: #{tpu_custom_call.1} parent=5 // pred_fallthru
        _
    $region6: #{tpu_custom_call.1} parent=1 // loop_footer
      %s32 = sadd.s32 1, %s28
    $region7: #{tpu_custom_call.1} parent=1 // loop_footer_branch
      %27 = sbr.rel target = $region3
    $region8: #{tpu_custom_call.1} parent=1 // loop_exit
      _
    %1791 = vsyncpa [#allocation3], 1
    %s1792 = scalar_lea.sflag [#allocation3], 1
    %1793 = vsyncpa %s1792, 1
    %1794 = vsyncpa [#allocation6], 1
    %s1795 = scalar_lea.sflag [#allocation6], 1
    %1796 = vsyncpa %s1795, 1
    %1797 = vsyncpa [#allocation9], 1
    %s1798 = scalar_lea.sflag [#allocation9], 1
    %1799 = vsyncpa %s1798, 1
    %1800 = vsyncpa [#allocation12], 1
    %1801 = vsyncpa [#allocation4], 1
    %s1802 = scalar_lea.sflag [#allocation4], 1
    %1803 = vsyncpa %s1802, 1

</llo_original>
